<compile_context>
chip_gen: v5e
topology: v5e:2x2
jax: 0.10.0
libtpu: 0.0.40
codegen_flags: <defaults>
</compile_context>

<pallas_src>
import functools
import math

import jax
import jax.numpy as jnp
from jax.experimental import pallas as pl
from jax.experimental.pallas import tpu as pltpu


def _gnn_layer_kernel(
    x_ref,         # (N, F)      all agents of this batch element
    mask_ref,      # (1, N)      sender mask (1.0 = valid)
    w_recv_ref,    # (F, 3H)     [msg_l | att_l | upd_x] L1 weights, receiver half
    b_recv_ref,    # (1, 3H)     [msg_b1 | att_b1 | upd_b1]
    w_send_t_ref,  # (2H, F)     [msg_r | att_r] L1 weights, sender half (transposed)
    aw2_ref,       # (1, H)      attention L2 weight (transposed)
    mw2_ref,       # (H, H)      message L2 weight
    uw1g_ref,      # (H, H)      update L1 weight, aggregated half
    uw2_ref,       # (H, F)      update L2 weight
    b2_ref,        # (1, H+1+F)  [msg_b2 | att_b2 | upd_b2]
    out_ref,       # (TI, F)
    *, hidden, agent_tile,
):
    f32 = jnp.float32
    H = hidden
    TI = agent_tile

    x_all = x_ref[...].astype(f32)                                # (N, F)
    start = pl.multiple_of(pl.program_id(1) * TI, TI)
    x_i = x_ref[pl.ds(start, TI), :].astype(f32)                  # (TI, F)

    # ---- fused L1 projections (one wide MXU matmul per side) ----
    left = jnp.dot(x_i, w_recv_ref[...], preferred_element_type=f32) + b_recv_ref[...]   # (TI, 3H)
    # sender side produced directly N-last: (2H, F) @ (F, N) -> (2H, N)
    right_t = jnp.dot(w_send_t_ref[...], x_all.T, preferred_element_type=f32)            # (2H, N)

    left_m = left[:, :H]                                          # (TI, H)
    left_a = left[:, H:2 * H]                                     # (TI, H)
    left_u = left[:, 2 * H:]                                      # (TI, H)
    right_m_t = right_t[:H, :]                                    # (H, N)
    right_a_t = right_t[H:, :]                                    # (H, N)

    b2 = b2_ref[...]                                              # (1, H+1+F)
    mb2 = b2[:, :H]                                               # (1, H)
    ab2 = b2[:, H:H + 1]                                          # (1, 1)
    ub2 = b2[:, H + 1:]                                           # (1, F)

    # ---- attention branch first: its (TI, H, N) temp dies before h_m is built ----
    h_a = jnp.maximum(left_a[:, :, None] + right_a_t[None, :, :], 0.0)       # (TI, H, N)
    logits = jnp.sum(h_a * aw2_ref[...][:, :, None], axis=1) + ab2           # (TI, N)

    # masked softmax over senders j (N on lanes -> lane reduces, lane-aligned mask)
    mask = mask_ref[...] > 0.5                                               # (1, N)
    logits = jnp.where(mask, logits, jnp.float32(-1e30))
    m = jnp.max(logits, axis=-1, keepdims=True)                              # (TI, 1)
    p = jnp.exp(logits - m)
    p = jnp.where(mask, p, 0.0)                                              # masked senders -> 0
    denom = jnp.sum(p, axis=-1, keepdims=True)                               # (TI, 1)
    has_valid = denom > 0.0
    inv_denom = pl.reciprocal(jnp.where(has_valid, denom, 1.0), approx=False)  # (TI, 1)

    # ---- message branch, aggregated with the unnormalized numerator p ----
    # sum_j w_ij * (h_ij @ W2 + b2) == (sum_j p_ij h_ij) / denom @ W2 + (sum_j w_ij) b2
    h_m = jnp.maximum(left_m[:, :, None] + right_m_t[None, :, :], 0.0)       # (TI, H, N)
    agg_un = jnp.sum(h_m * p[:, None, :], axis=-1)                           # (TI, H)
    agg_h = agg_un * inv_denom                                               # (TI, H)
    sum_w = jnp.where(has_valid, 1.0, 0.0)                                   # (TI, 1): 1 if any valid sender
    aggregated = (jnp.dot(agg_h, mw2_ref[...], preferred_element_type=f32)
                  + sum_w * mb2)                                             # (TI, H)

    # ---- update net on concat([x, aggregated]) (decomposed) + residual ----
    pre = left_u + jnp.dot(aggregated, uw1g_ref[...], preferred_element_type=f32)        # (TI, H)
    h_u = jnp.maximum(pre, 0.0)
    upd = jnp.dot(h_u, uw2_ref[...], preferred_element_type=f32) + ub2                   # (TI, F)
    out_ref[...] = (x_i + upd).astype(out_ref.dtype)


def _choose_agent_tile(N, H, F, vmem_budget_bytes):
    """Largest receiver tile whose live f32 temporaries fit the VMEM budget."""
    # Conservative bytes per receiver row: assume both (H, N) pairwise temporaries
    # coexist plus softmax rows and a few (., 3H)/(., F) temps.
    per_row = 4 * (2 * H * N + 4 * N + 12 * H + 4 * F)
    ti_cap = max(8, int(vmem_budget_bytes // per_row))
    if N <= ti_cap:
        return N
    for d in range(min(N, ti_cap), 0, -1):
        if N % d == 0 and (d % 8 == 0 or d == N):
            return d
    # TODO(synk): sender-axis (flash-style) tiling for huge N with awkward divisors.
    return N


def gnn_layer_forward(x, masks, params, *, agent_tile=None):
    """x: (B, N, F) float32, masks: (B, N) in {0,1}. Returns (B, N, F)."""
    B, N, F = x.shape
    H = params["msg_w2"].shape[0]
    f32 = jnp.float32

    # Per-generation VMEM budget -> receiver tile + explicit vmem limit.
    try:
        vmem_cap = int(pltpu.get_tpu_info().vmem_capacity_bytes)
    except Exception:
        vmem_cap = 64 * 1024 * 1024
    vmem_limit = max(16 << 20, min(vmem_cap - (4 << 20), 100 << 20))
    if agent_tile is None:
        agent_tile = _choose_agent_tile(N, H, F, int(0.4 * vmem_limit))
    TI = int(agent_tile)
    if N % TI != 0:
        raise ValueError("num_agents must be divisible by the agent tile")
    n_tiles = N // TI

    masks3 = masks.astype(f32).reshape(B, 1, N)

    # Split / pack the concat-input weights: no (B,N,N,2F) pairs tensor, and the
    # tiny per-net L1 matmuls fuse into wide ones.
    msg_w1 = params["msg_w1"].astype(f32)      # (2F, H)
    att_w1 = params["att_w1"].astype(f32)      # (2F, H)
    upd_w1 = params["upd_w1"].astype(f32)      # (F+H, H)
    w_recv = jnp.concatenate([msg_w1[:F], att_w1[:F], upd_w1[:F]], axis=1)        # (F, 3H)
    b_recv = jnp.concatenate([params["msg_b1"], params["att_b1"],
                              params["upd_b1"]]).reshape(1, 3 * H).astype(f32)    # (1, 3H)
    w_send_t = jnp.concatenate([msg_w1[F:], att_w1[F:]], axis=1).T                # (2H, F)
    aw2 = params["att_w2"].reshape(1, H).astype(f32)                              # (H,1) -> (1,H)
    mw2 = params["msg_w2"].astype(f32)                                            # (H, H)
    uw1g = upd_w1[F:]                                                             # (H, H)
    uw2 = params["upd_w2"].astype(f32)                                            # (H, F)
    b2 = jnp.concatenate([params["msg_b2"].reshape(-1),
                          params["att_b2"].reshape(-1),
                          params["upd_b2"].reshape(-1)]).reshape(1, H + 1 + F).astype(f32)

    weight_args = (w_recv, b_recv, w_send_t, aw2, mw2, uw1g, uw2, b2)

    def wspec(arr):
        nd = arr.ndim
        return pl.BlockSpec(arr.shape, lambda b, it, _nd=nd: (0,) * _nd)

    in_specs = [
        pl.BlockSpec((None, N, F), lambda b, it: (b, 0, 0)),     # x (all agents, reused across tiles)
        pl.BlockSpec((None, 1, N), lambda b, it: (b, 0, 0)),     # masks
    ] + [wspec(a) for a in weight_args]
    out_spec = pl.BlockSpec((None, TI, F), lambda b, it: (b, it, 0))

    kernel = functools.partial(_gnn_layer_kernel, hidden=H, agent_tile=TI)

    # Advisory cost estimate (compute-heavy, memory-light).
    flops = int(B * (2 * N * F * 3 * H + 2 * n_tiles * N * F * 2 * H
                     + 9 * N * N * H + 4 * N * H * H + 2 * N * H * F))
    transcendentals = int(B * N * N)
    bytes_accessed = int(4 * (2 * B * N * F + B * N
                              + sum(int(a.size) for a in weight_args)))

    return pl.pallas_call(
        kernel,
        out_shape=jax.ShapeDtypeStruct((B, N, F), x.dtype),
        grid_spec=pltpu.PrefetchScalarGridSpec(
            num_scalar_prefetch=0,
            grid=(B, n_tiles),
            in_specs=in_specs,
            out_specs=out_spec,
        ),
        compiler_params=pltpu.CompilerParams(
            dimension_semantics=("parallel", "parallel"),
            vmem_limit_bytes=int(vmem_limit),
        ),
        cost_estimate=pl.CostEstimate(
            flops=flops, transcendentals=transcendentals, bytes_accessed=bytes_accessed
        ),
    )(x, masks3, *weight_args)


def gnn_layer_reference(x, masks, p):
    """Pure-JAX mirror of the PyTorch forward (builds the full pairs tensor)."""
    B, N, F = x.shape
    x_exp = jnp.broadcast_to(x[:, :, None, :], (B, N, N, F))     # pairs[b,i,j] <- x[b,i]
    x_tr = jnp.broadcast_to(x[:, None, :, :], (B, N, N, F))      # pairs[b,i,j] <- x[b,j]
    pairs = jnp.concatenate([x_exp, x_tr], axis=-1)              # (B, N, N, 2F)

    def mlp(y, w1, b1, w2, b2):
        h = jnp.maximum(y @ w1 + b1, 0.0)
        return h @ w2 + b2

    messages = mlp(pairs, p["msg_w1"], p["msg_b1"], p["msg_w2"], p["msg_b2"])     # (B,N,N,H)
    logits = mlp(pairs, p["att_w1"], p["att_b1"], p["att_w2"], p["att_b2"])[..., 0]
    mask_e = jnp.broadcast_to(masks[:, None, :] > 0.5, logits.shape)              # mask senders j
    logits = jnp.where(mask_e, logits, -jnp.inf)
    attw = jax.nn.softmax(logits, axis=-1)
    attw = jnp.where(mask_e, attw, 0.0)
    agg = jnp.sum(messages * attw[..., None], axis=2)                             # (B,N,H)
    combined = jnp.concatenate([x, agg], axis=-1)
    upd = mlp(combined, p["upd_w1"], p["upd_b1"], p["upd_w2"], p["upd_b2"])
    return x + upd


if __name__ == "__main__":
    jax.config.update("jax_default_matmul_precision", "highest")

    B, N, F, H = 2, 8, 16, 32   # batch, num_agents, feature_dim, hidden_dim
    key = jax.random.PRNGKey(0)
    keys = jax.random.split(key, 14)

    def linear_init(kw, kb, fan_in, fan_out):
        bound = 1.0 / math.sqrt(fan_in)
        w = jax.random.uniform(kw, (fan_in, fan_out), jnp.float32, -bound, bound)
        b = jax.random.uniform(kb, (fan_out,), jnp.float32, -bound, bound)
        return w, b

    msg_w1, msg_b1 = linear_init(keys[0], keys[1], 2 * F, H)
    msg_w2, msg_b2 = linear_init(keys[2], keys[3], H, H)
    att_w1, att_b1 = linear_init(keys[4], keys[5], 2 * F, H)
    att_w2, att_b2 = linear_init(keys[6], keys[7], H, 1)
    upd_w1, upd_b1 = linear_init(keys[8], keys[9], F + H, H)
    upd_w2, upd_b2 = linear_init(keys[10], keys[11], H, F)

    params = dict(msg_w1=msg_w1, msg_b1=msg_b1, msg_w2=msg_w2, msg_b2=msg_b2,
                  att_w1=att_w1, att_b1=att_b1, att_w2=att_w2, att_b2=att_b2,
                  upd_w1=upd_w1, upd_b1=upd_b1, upd_w2=upd_w2, upd_b2=upd_b2)

    x = jax.random.normal(keys[12], (B, N, F), dtype=jnp.float32)
    masks = jnp.array([[1, 1, 1, 1, 1, 1, 0, 0],
                       [1, 0, 1, 1, 1, 1, 1, 1]], dtype=jnp.float32)

    out = gnn_layer_forward(x, masks, params)
    out = jax.block_until_ready(out)

    ref = gnn_layer_reference(x, masks, params)
    assert out.shape == (B, N, F)
    max_err = float(jnp.max(jnp.abs(out - ref)))
    assert jnp.allclose(out, ref, atol=1e-4, rtol=1e-4), f"max abs err {max_err}"

    print("KERNEL_OK")
</pallas_src>

<mosaic_0001>
module attributes {stable_mosaic.version = 11 : i64} {
  func.func @_gnn_layer_kernel(%arg0: i32, %arg1: i32, %arg2: memref<1x8x16xf32, #tpu.memory_space<vmem>>, %arg3: memref<1x1x8xf32, #tpu.memory_space<vmem>>, %arg4: memref<16x96xf32, #tpu.memory_space<vmem>>, %arg5: memref<1x96xf32, #tpu.memory_space<vmem>>, %arg6: memref<64x16xf32, #tpu.memory_space<vmem>>, %arg7: memref<1x32xf32, #tpu.memory_space<vmem>>, %arg8: memref<32x32xf32, #tpu.memory_space<vmem>>, %arg9: memref<32x32xf32, #tpu.memory_space<vmem>>, %arg10: memref<32x16xf32, #tpu.memory_space<vmem>>, %arg11: memref<1x49xf32, #tpu.memory_space<vmem>>, %arg12: memref<1x8x16xf32, #tpu.memory_space<vmem>>) attributes {dimension_semantics = [#tpu.dimension_semantics<parallel>, #tpu.dimension_semantics<parallel>], iteration_bounds = array<i64: 2, 1>, scalar_prefetch = 0 : i64, scratch_operands = 0 : i64, tpu.core_type = #tpu.core_type<tc>, window_params = [{transform_indices = @transform_0, window_bounds = array<i64: 1, 8, 16>}, {transform_indices = @transform_1, window_bounds = array<i64: 1, 1, 8>}, {pipeline_mode = #tpu.pipeline_mode<synchronous>, transform_indices = @transform_2, window_bounds = array<i64: 16, 96>}, {pipeline_mode = #tpu.pipeline_mode<synchronous>, transform_indices = @transform_3, window_bounds = array<i64: 1, 96>}, {pipeline_mode = #tpu.pipeline_mode<synchronous>, transform_indices = @transform_4, window_bounds = array<i64: 64, 16>}, {pipeline_mode = #tpu.pipeline_mode<synchronous>, transform_indices = @transform_5, window_bounds = array<i64: 1, 32>}, {pipeline_mode = #tpu.pipeline_mode<synchronous>, transform_indices = @transform_6, window_bounds = array<i64: 32, 32>}, {pipeline_mode = #tpu.pipeline_mode<synchronous>, transform_indices = @transform_7, window_bounds = array<i64: 32, 32>}, {pipeline_mode = #tpu.pipeline_mode<synchronous>, transform_indices = @transform_8, window_bounds = array<i64: 32, 16>}, {pipeline_mode = #tpu.pipeline_mode<synchronous>, transform_indices = @transform_9, window_bounds = array<i64: 1, 49>}, {transform_indices = @transform_10, window_bounds = array<i64: 1, 8, 16>}]} {
    %c0 = arith.constant 0 : index
    %c0_0 = arith.constant 0 : index
    %c0_1 = arith.constant 0 : index
    %0 = vector.load %arg2[%c0, %c0_0, %c0_1] : memref<1x8x16xf32, #tpu.memory_space<vmem>>, vector<1x8x16xf32>
    %1 = vector.shape_cast %0 : vector<1x8x16xf32> to vector<8x16xf32>
    %c8_i32 = arith.constant 8 : i32
    %2 = arith.muli %arg1, %c8_i32 : i32
    %3 = tpu.assume_multiple %2, 8 : i32
    %c0_2 = arith.constant 0 : index
    %4 = arith.index_cast %3 : i32 to index
    %c0_3 = arith.constant 0 : index
    %5 = vector.load %arg2[%c0_2, %4, %c0_3] : memref<1x8x16xf32, #tpu.memory_space<vmem>>, vector<1x8x16xf32>
    %6 = vector.shape_cast %5 : vector<1x8x16xf32> to vector<8x16xf32>
    %c0_4 = arith.constant 0 : index
    %c0_5 = arith.constant 0 : index
    %7 = vector.load %arg4[%c0_4, %c0_5] : memref<16x96xf32, #tpu.memory_space<vmem>>, vector<16x96xf32>
    %cst = arith.constant dense<0.000000e+00> : vector<8x96xf32>
    %8 = tpu.matmul %6, %7, %cst {dimension_numbers = #tpu.dot_dimension_numbers<[1], [0], [0], [1], [0, 0, 1, 1], [], []>, precision = #tpu.contract_precision<fp32>} : vector<8x16xf32>, vector<16x96xf32>, vector<8x96xf32> -> vector<8x96xf32>
    %c0_6 = arith.constant 0 : index
    %c0_7 = arith.constant 0 : index
    %9 = vector.load %arg5[%c0_6, %c0_7] : memref<1x96xf32, #tpu.memory_space<vmem>>, vector<1x96xf32>
    %10 = vector.broadcast %9 : vector<1x96xf32> to vector<8x96xf32>
    %11 = arith.addf %8, %10 : vector<8x96xf32>
    %c0_8 = arith.constant 0 : index
    %c0_9 = arith.constant 0 : index
    %12 = vector.load %arg6[%c0_8, %c0_9] : memref<64x16xf32, #tpu.memory_space<vmem>>, vector<64x16xf32>
    %13 = tpu.transpose %1, [1, 0] : vector<8x16xf32> -> vector<16x8xf32>
    %cst_10 = arith.constant dense<0.000000e+00> : vector<64x8xf32>
    %14 = tpu.matmul %12, %13, %cst_10 {dimension_numbers = #tpu.dot_dimension_numbers<[1], [0], [0], [1], [0, 0, 1, 1], [], []>, precision = #tpu.contract_precision<fp32>} : vector<64x16xf32>, vector<16x8xf32>, vector<64x8xf32> -> vector<64x8xf32>
    %15 = vector.extract_strided_slice %11 {offsets = [0, 0], sizes = [8, 32], strides = [1, 1]} : vector<8x96xf32> to vector<8x32xf32>
    %16 = vector.extract_strided_slice %11 {offsets = [0, 32], sizes = [8, 32], strides = [1, 1]} : vector<8x96xf32> to vector<8x32xf32>
    %17 = vector.extract_strided_slice %11 {offsets = [0, 64], sizes = [8, 32], strides = [1, 1]} : vector<8x96xf32> to vector<8x32xf32>
    %18 = vector.extract_strided_slice %14 {offsets = [0, 0], sizes = [32, 8], strides = [1, 1]} : vector<64x8xf32> to vector<32x8xf32>
    %19 = vector.extract_strided_slice %14 {offsets = [32, 0], sizes = [32, 8], strides = [1, 1]} : vector<64x8xf32> to vector<32x8xf32>
    %c0_11 = arith.constant 0 : index
    %c0_12 = arith.constant 0 : index
    %20 = vector.load %arg11[%c0_11, %c0_12] : memref<1x49xf32, #tpu.memory_space<vmem>>, vector<1x49xf32>
    %21 = vector.extract_strided_slice %20 {offsets = [0, 0], sizes = [1, 32], strides = [1, 1]} : vector<1x49xf32> to vector<1x32xf32>
    %22 = vector.extract_strided_slice %20 {offsets = [0, 32], sizes = [1, 1], strides = [1, 1]} : vector<1x49xf32> to vector<1x1xf32>
    %23 = vector.extract_strided_slice %20 {offsets = [0, 33], sizes = [1, 16], strides = [1, 1]} : vector<1x49xf32> to vector<1x16xf32>
    %24 = vector.shape_cast %16 : vector<8x32xf32> to vector<8x32x1xf32>
    %25 = vector.shape_cast %19 : vector<32x8xf32> to vector<1x32x8xf32>
    %26 = vector.broadcast %24 : vector<8x32x1xf32> to vector<8x32x8xf32>
    %27 = vector.broadcast %25 : vector<1x32x8xf32> to vector<8x32x8xf32>
    %28 = arith.addf %26, %27 : vector<8x32x8xf32>
    %cst_13 = arith.constant 0.000000e+00 : f32
    %29 = vector.broadcast %cst_13 : f32 to vector<8x32x8xf32>
    %30 = arith.maximumf %28, %29 : vector<8x32x8xf32>
    %c0_14 = arith.constant 0 : index
    %c0_15 = arith.constant 0 : index
    %31 = vector.load %arg7[%c0_14, %c0_15] : memref<1x32xf32, #tpu.memory_space<vmem>>, vector<1x32xf32>
    %32 = vector.shape_cast %31 : vector<1x32xf32> to vector<1x32x1xf32>
    %33 = vector.broadcast %32 : vector<1x32x1xf32> to vector<8x32x8xf32>
    %34 = arith.mulf %30, %33 : vector<8x32x8xf32>
    %cst_16 = arith.constant dense<0.000000e+00> : vector<8x8xf32>
    %35 = vector.multi_reduction <add>, %34, %cst_16 [1] : vector<8x32x8xf32> to vector<8x8xf32>
    %36 = vector.broadcast %22 : vector<1x1xf32> to vector<8x8xf32>
    %37 = arith.addf %35, %36 : vector<8x8xf32>
    %c0_17 = arith.constant 0 : index
    %c0_18 = arith.constant 0 : index
    %c0_19 = arith.constant 0 : index
    %38 = vector.load %arg3[%c0_17, %c0_18, %c0_19] : memref<1x1x8xf32, #tpu.memory_space<vmem>>, vector<1x1x8xf32>
    %39 = vector.shape_cast %38 : vector<1x1x8xf32> to vector<1x8xf32>
    %cst_20 = arith.constant 5.000000e-01 : f32
    %40 = vector.broadcast %cst_20 : f32 to vector<1x8xf32>
    %41 = arith.cmpf ogt, %39, %40 : vector<1x8xf32>
    %cst_21 = arith.constant -1.000000e+30 : f32
    %42 = vector.shape_cast %41 : vector<1x8xi1> to vector<1x8xi1>
    %43 = vector.broadcast %42 : vector<1x8xi1> to vector<8x8xi1>
    %44 = vector.broadcast %cst_21 : f32 to vector<8x8xf32>
    %45 = arith.select %43, %37, %44 : vector<8x8xi1>, vector<8x8xf32>
    %cst_22 = arith.constant dense<0xFF800000> : vector<8xf32>
    %46 = vector.multi_reduction <maximumf>, %45, %cst_22 [1] : vector<8x8xf32> to vector<8xf32>
    %47 = vector.shape_cast %46 : vector<8xf32> to vector<8x1xf32>
    %48 = vector.broadcast %47 : vector<8x1xf32> to vector<8x8xf32>
    %49 = arith.subf %45, %48 : vector<8x8xf32>
    %50 = math.exp %49 : vector<8x8xf32>
    %cst_23 = arith.constant 0.000000e+00 : f32
    %51 = vector.shape_cast %41 : vector<1x8xi1> to vector<1x8xi1>
    %52 = vector.broadcast %51 : vector<1x8xi1> to vector<8x8xi1>
    %53 = vector.broadcast %cst_23 : f32 to vector<8x8xf32>
    %54 = arith.select %52, %50, %53 : vector<8x8xi1>, vector<8x8xf32>
    %cst_24 = arith.constant dense<0.000000e+00> : vector<8xf32>
    %55 = vector.multi_reduction <add>, %54, %cst_24 [1] : vector<8x8xf32> to vector<8xf32>
    %56 = vector.shape_cast %55 : vector<8xf32> to vector<8x1xf32>
    %cst_25 = arith.constant 0.000000e+00 : f32
    %57 = vector.broadcast %cst_25 : f32 to vector<8x1xf32>
    %58 = arith.cmpf ogt, %56, %57 : vector<8x1xf32>
    %cst_26 = arith.constant 1.000000e+00 : f32
    %59 = vector.broadcast %cst_26 : f32 to vector<8x1xf32>
    %60 = arith.select %58, %56, %59 : vector<8x1xi1>, vector<8x1xf32>
    %61 = tpu.reciprocal %60 : vector<8x1xf32> -> vector<8x1xf32>
    %62 = vector.shape_cast %15 : vector<8x32xf32> to vector<8x32x1xf32>
    %63 = vector.shape_cast %18 : vector<32x8xf32> to vector<1x32x8xf32>
    %64 = vector.broadcast %62 : vector<8x32x1xf32> to vector<8x32x8xf32>
    %65 = vector.broadcast %63 : vector<1x32x8xf32> to vector<8x32x8xf32>
    %66 = arith.addf %64, %65 : vector<8x32x8xf32>
    %cst_27 = arith.constant 0.000000e+00 : f32
    %67 = vector.broadcast %cst_27 : f32 to vector<8x32x8xf32>
    %68 = arith.maximumf %66, %67 : vector<8x32x8xf32>
    %69 = vector.shape_cast %54 : vector<8x8xf32> to vector<8x1x8xf32>
    %70 = vector.broadcast %69 : vector<8x1x8xf32> to vector<8x32x8xf32>
    %71 = arith.mulf %68, %70 : vector<8x32x8xf32>
    %cst_28 = arith.constant dense<0.000000e+00> : vector<8x32xf32>
    %72 = vector.multi_reduction <add>, %71, %cst_28 [2] : vector<8x32x8xf32> to vector<8x32xf32>
    %73 = vector.broadcast %61 : vector<8x1xf32> to vector<8x32xf32>
    %74 = arith.mulf %72, %73 : vector<8x32xf32>
    %cst_29 = arith.constant 1.000000e+00 : f32
    %cst_30 = arith.constant 0.000000e+00 : f32
    %75 = vector.broadcast %cst_29 : f32 to vector<8x1xf32>
    %76 = vector.broadcast %cst_30 : f32 to vector<8x1xf32>
    %77 = arith.select %58, %75, %76 : vector<8x1xi1>, vector<8x1xf32>
    %c0_31 = arith.constant 0 : index
    %c0_32 = arith.constant 0 : index
    %78 = vector.load %arg8[%c0_31, %c0_32] : memref<32x32xf32, #tpu.memory_space<vmem>>, vector<32x32xf32>
    %cst_33 = arith.constant dense<0.000000e+00> : vector<8x32xf32>
    %79 = tpu.matmul %74, %78, %cst_33 {dimension_numbers = #tpu.dot_dimension_numbers<[1], [0], [0], [1], [0, 0, 1, 1], [], []>, precision = #tpu.contract_precision<fp32>} : vector<8x32xf32>, vector<32x32xf32>, vector<8x32xf32> -> vector<8x32xf32>
    %80 = vector.broadcast %77 : vector<8x1xf32> to vector<8x32xf32>
    %81 = vector.broadcast %21 : vector<1x32xf32> to vector<8x32xf32>
    %82 = arith.mulf %80, %81 : vector<8x32xf32>
    %83 = arith.addf %79, %82 : vector<8x32xf32>
    %c0_34 = arith.constant 0 : index
    %c0_35 = arith.constant 0 : index
    %84 = vector.load %arg9[%c0_34, %c0_35] : memref<32x32xf32, #tpu.memory_space<vmem>>, vector<32x32xf32>
    %cst_36 = arith.constant dense<0.000000e+00> : vector<8x32xf32>
    %85 = tpu.matmul %83, %84, %cst_36 {dimension_numbers = #tpu.dot_dimension_numbers<[1], [0], [0], [1], [0, 0, 1, 1], [], []>, precision = #tpu.contract_precision<fp32>} : vector<8x32xf32>, vector<32x32xf32>, vector<8x32xf32> -> vector<8x32xf32>
    %86 = arith.addf %17, %85 : vector<8x32xf32>
    %cst_37 = arith.constant 0.000000e+00 : f32
    %87 = vector.broadcast %cst_37 : f32 to vector<8x32xf32>
    %88 = arith.maximumf %86, %87 : vector<8x32xf32>
    %c0_38 = arith.constant 0 : index
    %c0_39 = arith.constant 0 : index
    %89 = vector.load %arg10[%c0_38, %c0_39] : memref<32x16xf32, #tpu.memory_space<vmem>>, vector<32x16xf32>
    %cst_40 = arith.constant dense<0.000000e+00> : vector<8x16xf32>
    %90 = tpu.matmul %88, %89, %cst_40 {dimension_numbers = #tpu.dot_dimension_numbers<[1], [0], [0], [1], [0, 0, 1, 1], [], []>, precision = #tpu.contract_precision<fp32>} : vector<8x32xf32>, vector<32x16xf32>, vector<8x16xf32> -> vector<8x16xf32>
    %91 = vector.broadcast %23 : vector<1x16xf32> to vector<8x16xf32>
    %92 = arith.addf %90, %91 : vector<8x16xf32>
    %93 = arith.addf %6, %92 : vector<8x16xf32>
    %c0_41 = arith.constant 0 : index
    %c0_42 = arith.constant 0 : index
    %c0_43 = arith.constant 0 : index
    %94 = vector.load %arg12[%c0_41, %c0_42, %c0_43] : memref<1x8x16xf32, #tpu.memory_space<vmem>>, vector<1x8x16xf32>
    %95 = vector.shape_cast %94 : vector<1x8x16xf32> to vector<8x16xf32>
    %96 = vector.shape_cast %93 : vector<8x16xf32> to vector<1x8x16xf32>
    tpu.vector_store %arg12[%c0_41, %c0_42, %c0_43], %96 {strides = array<i32>} : memref<1x8x16xf32, #tpu.memory_space<vmem>>, vector<1x8x16xf32>,
    return
  }
  func.func @transform_0(%arg0: i32, %arg1: i32) -> (i32, i32, i32) {
    %c0_i32 = arith.constant 0 : i32
    %c0_i32_0 = arith.constant 0 : i32
    %c0_i32_1 = arith.constant 0 : i32
    return %arg0, %c0_i32, %c0_i32_0 : i32, i32, i32
  }
  func.func @transform_1(%arg0: i32, %arg1: i32) -> (i32, i32, i32) {
    %c0_i32 = arith.constant 0 : i32
    %c0_i32_0 = arith.constant 0 : i32
    %c0_i32_1 = arith.constant 0 : i32
    return %arg0, %c0_i32, %c0_i32_0 : i32, i32, i32
  }
  func.func @transform_2(%arg0: i32, %arg1: i32) -> (i32, i32) {
    %c0_i32 = arith.constant 0 : i32
    %c0_i32_0 = arith.constant 0 : i32
    %c0_i32_1 = arith.constant 0 : i32
    return %c0_i32, %c0_i32_0 : i32, i32
  }
  func.func @transform_3(%arg0: i32, %arg1: i32) -> (i32, i32) {
    %c0_i32 = arith.constant 0 : i32
    %c0_i32_0 = arith.constant 0 : i32
    %c0_i32_1 = arith.constant 0 : i32
    return %c0_i32, %c0_i32_0 : i32, i32
  }
  func.func @transform_4(%arg0: i32, %arg1: i32) -> (i32, i32) {
    %c0_i32 = arith.constant 0 : i32
    %c0_i32_0 = arith.constant 0 : i32
    %c0_i32_1 = arith.constant 0 : i32
    return %c0_i32, %c0_i32_0 : i32, i32
  }
  func.func @transform_5(%arg0: i32, %arg1: i32) -> (i32, i32) {
    %c0_i32 = arith.constant 0 : i32
    %c0_i32_0 = arith.constant 0 : i32
    %c0_i32_1 = arith.constant 0 : i32
    return %c0_i32, %c0_i32_0 : i32, i32
  }
  func.func @transform_6(%arg0: i32, %arg1: i32) -> (i32, i32) {
    %c0_i32 = arith.constant 0 : i32
    %c0_i32_0 = arith.constant 0 : i32
    %c0_i32_1 = arith.constant 0 : i32
    return %c0_i32, %c0_i32_0 : i32, i32
  }
  func.func @transform_7(%arg0: i32, %arg1: i32) -> (i32, i32) {
    %c0_i32 = arith.constant 0 : i32
    %c0_i32_0 = arith.constant 0 : i32
    %c0_i32_1 = arith.constant 0 : i32
    return %c0_i32, %c0_i32_0 : i32, i32
  }
  func.func @transform_8(%arg0: i32, %arg1: i32) -> (i32, i32) {
    %c0_i32 = arith.constant 0 : i32
    %c0_i32_0 = arith.constant 0 : i32
    %c0_i32_1 = arith.constant 0 : i32
    return %c0_i32, %c0_i32_0 : i32, i32
  }
  func.func @transform_9(%arg0: i32, %arg1: i32) -> (i32, i32) {
    %c0_i32 = arith.constant 0 : i32
    %c0_i32_0 = arith.constant 0 : i32
    %c0_i32_1 = arith.constant 0 : i32
    return %c0_i32, %c0_i32_0 : i32, i32
  }
  func.func @transform_10(%arg0: i32, %arg1: i32) -> (i32, i32, i32) {
    %c0_i32 = arith.constant 0 : i32
    %c0_i32_0 = arith.constant 0 : i32
    return %arg0, %arg1, %c0_i32 : i32, i32, i32
  }
}

</mosaic_0001>

<llo_original>
// kernel: tpu_custom_call.1
$region0: #{tpu_custom_call.1}
  #allocation0 [shape = 'u32[]', space=smem, size = 0x4, offset = 0x4, fixed_abs, tag = 'smem constant byte address 0x4 - core index']
  #allocation1 [shape = 'u32[72,128]{1,0:T(1,128)}', space=vmem, size = 0x9000, scoped, tag = 'internal scratch']
  %s0 = inlined_call_operand.vmem [shape: f32[2,8,16], index: 0, kind: input, shape index: {}]
  %s1 = inlined_call_operand.vmem [shape: f32[2,1,8], index: 1, kind: input, shape index: {}]
  %s2 = inlined_call_operand.vmem [shape: f32[16,96], index: 2, kind: input, shape index: {}]
  %s3 = inlined_call_operand.vmem [shape: f32[1,96], index: 3, kind: input, shape index: {}]
  %s4 = inlined_call_operand.vmem [shape: f32[64,16], index: 4, kind: input, shape index: {}]
  %s5 = inlined_call_operand.vmem [shape: f32[1,32], index: 5, kind: input, shape index: {}]
  %s6 = inlined_call_operand.vmem [shape: f32[32,32], index: 6, kind: input, shape index: {}]
  %s7 = inlined_call_operand.vmem [shape: f32[32,32], index: 7, kind: input, shape index: {}]
  %s8 = inlined_call_operand.vmem [shape: f32[32,16], index: 8, kind: input, shape index: {}]
  %s9 = inlined_call_operand.vmem [shape: f32[1,49], index: 9, kind: input, shape index: {}]
  %s10 = inlined_call_operand.hbm [shape: f32[2,8,16], index: 10, kind: output, shape index: {}]
  %s11 = sld [smem:[#allocation0]]
  $region73: #{tpu_custom_call.1} parent=0
    _
  %s13 = ssub.s32 1, %s11
  %s14 = scalar_select 0, %s13, %s11
  $region1: #{tpu_custom_call.1} parent=0
    #allocation2 [shape = 'u8[8192]{0}', space=vmem, size = 0x2000, scoped, tag = 'output window, operand 0']
    #allocation3 [shape = 's32[2]{0}', space=sflag, size = 0x8, scoped, tag = 'scoped memory for tpu_custom_call.1']
    %15 = vsyncpa [#allocation3], 0
    %s16 = scalar_lea.sflag [#allocation3], 1
    %17 = vsyncpa %s16, 0
    loop: start=0, step=1, limit=4
    $region2: #{tpu_custom_call.1} parent=1 // loop_pre_header
      _
    $region3: #{tpu_custom_call.1} parent=1 // loop_header
      %s19 = sphi 0, %s23
      %p20 = scmp.ge.s32.totalorder %s19, 4
      %s26 = sphi 0, %s38
      %s27 = sphi 0, %s34
      %s28 = sphi 0, %s26
      %s29 = sphi 0, %s27
      %s30 = sphi 0, %s28
      %s31 = sphi 0, %s29
      %s41 = sphi 0, %s43
      %s44 = sphi 0, %s41
      %s45 = sphi 0, %s44
      %s61 = sphi 0, %s45
      %s67 = sphi 0, %s69
      %s70 = sphi 0, %s67
      %s71 = sphi 0, %s70
      %s87 = sphi 0, %s71
      %s91 = sphi 0, %s91
      %s93 = sphi 0, %s91
      %s94 = sphi 0, %s93
      %s108 = sphi 0, %s94
      %s112 = sphi 0, %s112
      %s114 = sphi 0, %s112
      %s115 = sphi 0, %s114
      %s129 = sphi 0, %s115
      %s133 = sphi 0, %s133
      %s135 = sphi 0, %s133
      %s136 = sphi 0, %s135
      %s150 = sphi 0, %s136
      %s154 = sphi 0, %s154
      %s156 = sphi 0, %s154
      %s157 = sphi 0, %s156
      %s171 = sphi 0, %s157
      %s175 = sphi 0, %s175
      %s177 = sphi 0, %s175
      %s178 = sphi 0, %s177
      %s192 = sphi 0, %s178
      %s196 = sphi 0, %s196
      %s198 = sphi 0, %s196
      %s199 = sphi 0, %s198
      %s213 = sphi 0, %s199
      %s217 = sphi 0, %s217
      %s219 = sphi 0, %s217
      %s220 = sphi 0, %s219
      %s234 = sphi 0, %s220
      %s238 = sphi 0, %s238
      %s240 = sphi 0, %s238
      %s241 = sphi 0, %s240
      %s255 = sphi 0, %s241
      %s263 = sphi 0, %s265
      %s266 = sphi 0, %s263
      %s267 = sphi 0, %s266
      %s283 = sphi 0, %s267
    $region4: #{tpu_custom_call.1} parent=1 // loop_header_branch
      %22 = sbr.rel (%p20) target = $region8
    $region5: #{tpu_custom_call.1} parent=1 // loop_body
      %s24 = ssub.s32 %s19, 1
      %s25 = ssub.s32 %s19, 2
      %s32 = sadd.s32 1, %s27
      %p33 = scmp.ge.s32.totalorder %s32, 1
      %s34 = scalar_select %p33, 0, %s32
      %s35 = sadd.s32 1, %s26
      %s36 = scalar_select %p33, %s35, %s26
      %p37 = scmp.ge.s32.totalorder %s36, 2
      %s38 = scalar_select %p37, 0, %s36
      %s39 = ssub.s32 %s26, %s38
      %p40 = scmp.eq.s32.totalorder %s39, 0
      %s42 = sadd.s32 %s41, 1
      %s43 = scalar_select %p40, %s41, %s42
      %p46 = pneg %p40
      %p47 = scmp.eq.s32.totalorder %s19, 1
      %p48 = por %p46, %p47
      %p49 = scmp.ne.s32.totalorder %s41, %s44
      %p50 = scmp.eq.s32.totalorder %s19, 0
      %p51 = por %p49, %p50
      %p52 = scmp.ne.s32.totalorder %s41, %s44
      %p53 = scmp.eq.s32.totalorder %s24, 1
      %p54 = por %p52, %p53
      %p55 = scmp.ne.s32.totalorder %s44, %s45
      %p56 = scmp.eq.s32.totalorder %s24, 0
      %p57 = por %p55, %p56
      %p58 = scmp.ne.s32.totalorder %s44, %s45
      %p59 = scmp.eq.s32.totalorder %s25, 1
      %p60 = por %p58, %p59
      %p62 = scmp.ne.s32.totalorder %s45, %s61
      %p63 = scmp.eq.s32.totalorder %s25, 0
      %p64 = por %p62, %p63
      %s65 = ssub.s32 %s26, %s38
      %p66 = scmp.eq.s32.totalorder %s65, 0
      %s68 = sadd.s32 %s67, 1
      %s69 = scalar_select %p66, %s67, %s68
      %p72 = pneg %p66
      %p73 = scmp.eq.s32.totalorder %s19, 1
      %p74 = por %p72, %p73
      %p75 = scmp.ne.s32.totalorder %s67, %s70
      %p76 = scmp.eq.s32.totalorder %s19, 0
      %p77 = por %p75, %p76
      %p78 = scmp.ne.s32.totalorder %s67, %s70
      %p79 = scmp.eq.s32.totalorder %s24, 1
      %p80 = por %p78, %p79
      %p81 = scmp.ne.s32.totalorder %s70, %s71
      %p82 = scmp.eq.s32.totalorder %s24, 0
      %p83 = por %p81, %p82
      %p84 = scmp.ne.s32.totalorder %s70, %s71
      %p85 = scmp.eq.s32.totalorder %s25, 1
      %p86 = por %p84, %p85
      %p88 = scmp.ne.s32.totalorder %s71, %s87
      %p89 = scmp.eq.s32.totalorder %s25, 0
      %p90 = por %p88, %p89
      %s92 = sadd.s32 %s91, 1
      %p95 = scmp.eq.s32.totalorder %s19, 1
      %p96 = scmp.ne.s32.totalorder %s91, %s93
      %p97 = scmp.eq.s32.totalorder %s19, 0
      %p98 = por %p96, %p97
      %p99 = scmp.ne.s32.totalorder %s91, %s93
      %p100 = scmp.eq.s32.totalorder %s24, 1
      %p101 = por %p99, %p100
      %p102 = scmp.ne.s32.totalorder %s93, %s94
      %p103 = scmp.eq.s32.totalorder %s24, 0
      %p104 = por %p102, %p103
      %p105 = scmp.ne.s32.totalorder %s93, %s94
      %p106 = scmp.eq.s32.totalorder %s25, 1
      %p107 = por %p105, %p106
      %p109 = scmp.ne.s32.totalorder %s94, %s108
      %p110 = scmp.eq.s32.totalorder %s25, 0
      %p111 = por %p109, %p110
      %s113 = sadd.s32 %s112, 1
      %p116 = scmp.eq.s32.totalorder %s19, 1
      %p117 = scmp.ne.s32.totalorder %s112, %s114
      %p118 = scmp.eq.s32.totalorder %s19, 0
      %p119 = por %p117, %p118
      %p120 = scmp.ne.s32.totalorder %s112, %s114
      %p121 = scmp.eq.s32.totalorder %s24, 1
      %p122 = por %p120, %p121
      %p123 = scmp.ne.s32.totalorder %s114, %s115
      %p124 = scmp.eq.s32.totalorder %s24, 0
      %p125 = por %p123, %p124
      %p126 = scmp.ne.s32.totalorder %s114, %s115
      %p127 = scmp.eq.s32.totalorder %s25, 1
      %p128 = por %p126, %p127
      %p130 = scmp.ne.s32.totalorder %s115, %s129
      %p131 = scmp.eq.s32.totalorder %s25, 0
      %p132 = por %p130, %p131
      %s134 = sadd.s32 %s133, 1
      %p137 = scmp.eq.s32.totalorder %s19, 1
      %p138 = scmp.ne.s32.totalorder %s133, %s135
      %p139 = scmp.eq.s32.totalorder %s19, 0
      %p140 = por %p138, %p139
      %p141 = scmp.ne.s32.totalorder %s133, %s135
      %p142 = scmp.eq.s32.totalorder %s24, 1
      %p143 = por %p141, %p142
      %p144 = scmp.ne.s32.totalorder %s135, %s136
      %p145 = scmp.eq.s32.totalorder %s24, 0
      %p146 = por %p144, %p145
      %p147 = scmp.ne.s32.totalorder %s135, %s136
      %p148 = scmp.eq.s32.totalorder %s25, 1
      %p149 = por %p147, %p148
      %p151 = scmp.ne.s32.totalorder %s136, %s150
      %p152 = scmp.eq.s32.totalorder %s25, 0
      %p153 = por %p151, %p152
      %s155 = sadd.s32 %s154, 1
      %p158 = scmp.eq.s32.totalorder %s19, 1
      %p159 = scmp.ne.s32.totalorder %s154, %s156
      %p160 = scmp.eq.s32.totalorder %s19, 0
      %p161 = por %p159, %p160
      %p162 = scmp.ne.s32.totalorder %s154, %s156
      %p163 = scmp.eq.s32.totalorder %s24, 1
      %p164 = por %p162, %p163
      %p165 = scmp.ne.s32.totalorder %s156, %s157
      %p166 = scmp.eq.s32.totalorder %s24, 0
      %p167 = por %p165, %p166
      %p168 = scmp.ne.s32.totalorder %s156, %s157
      %p169 = scmp.eq.s32.totalorder %s25, 1
      %p170 = por %p168, %p169
      %p172 = scmp.ne.s32.totalorder %s157, %s171
      %p173 = scmp.eq.s32.totalorder %s25, 0
      %p174 = por %p172, %p173
      %s176 = sadd.s32 %s175, 1
      %p179 = scmp.eq.s32.totalorder %s19, 1
      %p180 = scmp.ne.s32.totalorder %s175, %s177
      %p181 = scmp.eq.s32.totalorder %s19, 0
      %p182 = por %p180, %p181
      %p183 = scmp.ne.s32.totalorder %s175, %s177
      %p184 = scmp.eq.s32.totalorder %s24, 1
      %p185 = por %p183, %p184
      %p186 = scmp.ne.s32.totalorder %s177, %s178
      %p187 = scmp.eq.s32.totalorder %s24, 0
      %p188 = por %p186, %p187
      %p189 = scmp.ne.s32.totalorder %s177, %s178
      %p190 = scmp.eq.s32.totalorder %s25, 1
      %p191 = por %p189, %p190
      %p193 = scmp.ne.s32.totalorder %s178, %s192
      %p194 = scmp.eq.s32.totalorder %s25, 0
      %p195 = por %p193, %p194
      %s197 = sadd.s32 %s196, 1
      %p200 = scmp.eq.s32.totalorder %s19, 1
      %p201 = scmp.ne.s32.totalorder %s196, %s198
      %p202 = scmp.eq.s32.totalorder %s19, 0
      %p203 = por %p201, %p202
      %p204 = scmp.ne.s32.totalorder %s196, %s198
      %p205 = scmp.eq.s32.totalorder %s24, 1
      %p206 = por %p204, %p205
      %p207 = scmp.ne.s32.totalorder %s198, %s199
      %p208 = scmp.eq.s32.totalorder %s24, 0
      %p209 = por %p207, %p208
      %p210 = scmp.ne.s32.totalorder %s198, %s199
      %p211 = scmp.eq.s32.totalorder %s25, 1
      %p212 = por %p210, %p211
      %p214 = scmp.ne.s32.totalorder %s199, %s213
      %p215 = scmp.eq.s32.totalorder %s25, 0
      %p216 = por %p214, %p215
      %s218 = sadd.s32 %s217, 1
      %p221 = scmp.eq.s32.totalorder %s19, 1
      %p222 = scmp.ne.s32.totalorder %s217, %s219
      %p223 = scmp.eq.s32.totalorder %s19, 0
      %p224 = por %p222, %p223
      %p225 = scmp.ne.s32.totalorder %s217, %s219
      %p226 = scmp.eq.s32.totalorder %s24, 1
      %p227 = por %p225, %p226
      %p228 = scmp.ne.s32.totalorder %s219, %s220
      %p229 = scmp.eq.s32.totalorder %s24, 0
      %p230 = por %p228, %p229
      %p231 = scmp.ne.s32.totalorder %s219, %s220
      %p232 = scmp.eq.s32.totalorder %s25, 1
      %p233 = por %p231, %p232
      %p235 = scmp.ne.s32.totalorder %s220, %s234
      %p236 = scmp.eq.s32.totalorder %s25, 0
      %p237 = por %p235, %p236
      %s239 = sadd.s32 %s238, 1
      %p242 = scmp.eq.s32.totalorder %s19, 1
      %p243 = scmp.ne.s32.totalorder %s238, %s240
      %p244 = scmp.eq.s32.totalorder %s19, 0
      %p245 = por %p243, %p244
      %p246 = scmp.ne.s32.totalorder %s238, %s240
      %p247 = scmp.eq.s32.totalorder %s24, 1
      %p248 = por %p246, %p247
      %p249 = scmp.ne.s32.totalorder %s240, %s241
      %p250 = scmp.eq.s32.totalorder %s24, 0
      %p251 = por %p249, %p250
      %p252 = scmp.ne.s32.totalorder %s240, %s241
      %p253 = scmp.eq.s32.totalorder %s25, 1
      %p254 = por %p252, %p253
      %p256 = scmp.ne.s32.totalorder %s241, %s255
      %p257 = scmp.eq.s32.totalorder %s25, 0
      %p258 = por %p256, %p257
      %s259 = ssub.s32 %s26, %s38
      %s260 = ssub.s32 %s27, %s34
      %s261 = sor.u32 %s259, %s260
      %p262 = scmp.eq.s32.totalorder %s261, 0
      %s264 = sadd.s32 %s263, 1
      %s265 = scalar_select %p262, %s263, %s264
      %p268 = pneg %p262
      %p269 = scmp.eq.s32.totalorder %s19, 1
      %p270 = por %p268, %p269
      %p271 = scmp.ne.s32.totalorder %s263, %s266
      %p272 = scmp.eq.s32.totalorder %s19, 0
      %p273 = por %p271, %p272
      %p274 = scmp.ne.s32.totalorder %s263, %s266
      %p275 = scmp.eq.s32.totalorder %s24, 1
      %p276 = por %p274, %p275
      %p277 = scmp.ne.s32.totalorder %s266, %s267
      %p278 = scmp.eq.s32.totalorder %s24, 0
      %p279 = por %p277, %p278
      %p280 = scmp.ne.s32.totalorder %s266, %s267
      %p281 = scmp.eq.s32.totalorder %s25, 1
      %p282 = por %p280, %p281
      %p284 = scmp.ne.s32.totalorder %s267, %s283
      %p285 = scmp.eq.s32.totalorder %s25, 0
      %p286 = por %p284, %p285
      %p287 = scmp.le.s32.totalorder 1, %s19
      %p288 = scmp.lt.s32.totalorder %s19, 3
      %p289 = pnand %p287, %p288
      %p290 = pneg %p289
      // Predicated region
      $region9: #{tpu_custom_call.1} parent=5 // pred_check
        _
      $region10: #{tpu_custom_call.1} parent=5 // pred_check_branch
        %292 = sbr.rel (%p289) target = $region12
      $region11: #{tpu_custom_call.1} parent=5 // pred_region
        %s293 = ssub.s32 %s19, 1
        // Predicated region
        $region13: #{tpu_custom_call.1} parent=11 // pred_check
          %p294 = pneg %p104
        $region14: #{tpu_custom_call.1} parent=11 // pred_check_branch
          %296 = sbr.rel (%p294) target = $region16
        $region15: #{tpu_custom_call.1} parent=11 // pred_region
          _
        $region16: #{tpu_custom_call.1} parent=11 // pred_fallthru
          _
        // Predicated region
        $region17: #{tpu_custom_call.1} parent=11 // pred_check
          %p297 = pneg %p125
        $region18: #{tpu_custom_call.1} parent=11 // pred_check_branch
          %299 = sbr.rel (%p297) target = $region20
        $region19: #{tpu_custom_call.1} parent=11 // pred_region
          _
        $region20: #{tpu_custom_call.1} parent=11 // pred_fallthru
          _
        // Predicated region
        $region21: #{tpu_custom_call.1} parent=11 // pred_check
          %p300 = pneg %p146
        $region22: #{tpu_custom_call.1} parent=11 // pred_check_branch
          %302 = sbr.rel (%p300) target = $region24
        $region23: #{tpu_custom_call.1} parent=11 // pred_region
          _
        $region24: #{tpu_custom_call.1} parent=11 // pred_fallthru
          _
        // Predicated region
        $region25: #{tpu_custom_call.1} parent=11 // pred_check
          %p303 = pneg %p167
        $region26: #{tpu_custom_call.1} parent=11 // pred_check_branch
          %305 = sbr.rel (%p303) target = $region28
        $region27: #{tpu_custom_call.1} parent=11 // pred_region
          _
        $region28: #{tpu_custom_call.1} parent=11 // pred_fallthru
          _
        // Predicated region
        $region29: #{tpu_custom_call.1} parent=11 // pred_check
          %p306 = pneg %p188
        $region30: #{tpu_custom_call.1} parent=11 // pred_check_branch
          %308 = sbr.rel (%p306) target = $region32
        $region31: #{tpu_custom_call.1} parent=11 // pred_region
          _
        $region32: #{tpu_custom_call.1} parent=11 // pred_fallthru
          _
        // Predicated region
        $region33: #{tpu_custom_call.1} parent=11 // pred_check
          %p309 = pneg %p209
        $region34: #{tpu_custom_call.1} parent=11 // pred_check_branch
          %311 = sbr.rel (%p309) target = $region36
        $region35: #{tpu_custom_call.1} parent=11 // pred_region
          _
        $region36: #{tpu_custom_call.1} parent=11 // pred_fallthru
          _
        // Predicated region
        $region37: #{tpu_custom_call.1} parent=11 // pred_check
          %p312 = pneg %p230
        $region38: #{tpu_custom_call.1} parent=11 // pred_check_branch
          %314 = sbr.rel (%p312) target = $region40
        $region39: #{tpu_custom_call.1} parent=11 // pred_region
          _
        $region40: #{tpu_custom_call.1} parent=11 // pred_fallthru
          _
        // Predicated region
        $region41: #{tpu_custom_call.1} parent=11 // pred_check
          %p315 = pneg %p251
        $region42: #{tpu_custom_call.1} parent=11 // pred_check_branch
          %317 = sbr.rel (%p315) target = $region44
        $region43: #{tpu_custom_call.1} parent=11 // pred_region
          _
        $region44: #{tpu_custom_call.1} parent=11 // pred_fallthru
          _
      $region12: #{tpu_custom_call.1} parent=5 // pred_fallthru
        _
      %p318 = scmp.lt.s32.totalorder %s19, 2
      // Predicated region
      $region45: #{tpu_custom_call.1} parent=5 // pred_check
        %p319 = pneg %p318
      $region46: #{tpu_custom_call.1} parent=5 // pred_check_branch
        %321 = sbr.rel (%p319) target = $region48
      $region47: #{tpu_custom_call.1} parent=5 // pred_region
        // Predicated region
        $region49: #{tpu_custom_call.1} parent=47 // pred_check
          %p322 = pneg %p51
        $region50: #{tpu_custom_call.1} parent=47 // pred_check_branch
          %324 = sbr.rel (%p322) target = $region52
        $region51: #{tpu_custom_call.1} parent=47 // pred_region
          %p325 = scmp.lt.s32.totalorder %s26, 1
          %s326 = scalar_select %p325, %s26, 1
          %s327 = smul.addr %s326, 8
          %s328 = scalar_lea.vmem %s0, %s327
        $region52: #{tpu_custom_call.1} parent=47 // pred_fallthru
          _
        // Predicated region
        $region53: #{tpu_custom_call.1} parent=47 // pred_check
          %p329 = pneg %p77
        $region54: #{tpu_custom_call.1} parent=47 // pred_check_branch
          %331 = sbr.rel (%p329) target = $region56
        $region55: #{tpu_custom_call.1} parent=47 // pred_region
          %p332 = scmp.lt.s32.totalorder %s26, 1
          %s333 = scalar_select %p332, %s26, 1
          %s334 = scalar_lea.vmem %s1, %s333
        $region56: #{tpu_custom_call.1} parent=47 // pred_fallthru
          _
      $region48: #{tpu_custom_call.1} parent=5 // pred_fallthru
        _
      %p335 = scmp.le.s32.totalorder 1, %s19
      %p336 = scmp.lt.s32.totalorder %s19, 3
      %p337 = pnand %p335, %p336
      %p338 = pneg %p337
      // Predicated region
      $region57: #{tpu_custom_call.1} parent=5 // pred_check
        _
      $region58: #{tpu_custom_call.1} parent=5 // pred_check_branch
        %340 = sbr.rel (%p337) target = $region60
      $region59: #{tpu_custom_call.1} parent=5 // pred_region
        %s341 = ssub.s32 %s19, 1
        %p342 = scmp.lt.s32.totalorder %s28, 1
        %s343 = scalar_select %p342, %s28, 1
        %s344 = smul.addr %s343, 8
        %s345 = scalar_lea.vmem %s0, %s344
        %p346 = pneg %p57
        %p347 = pneg %p54
        %p348 = scmp.lt.s32.totalorder %s28, 1
        %s349 = scalar_select %p348, %s28, 1
        %s350 = scalar_lea.vmem %s1, %s349
        %p351 = pneg %p83
        %p352 = pneg %p80
        %p353 = pneg %p104
        %p354 = pneg %p101
        %p355 = pneg %p125
        %p356 = pneg %p122
        %p357 = pneg %p146
        %p358 = pneg %p143
        %p359 = pneg %p167
        %p360 = pneg %p164
        %p361 = pneg %p188
        %p362 = pneg %p185
        %p363 = pneg %p209
        %p364 = pneg %p206
        %p365 = pneg %p230
        %p366 = pneg %p227
        %p367 = pneg %p251
        %p368 = pneg %p248
        %p369 = pneg %p279
        %p370 = pneg %p276
        %s371 = sand.u32 %s266, 1
        %s372 = scalar_lea.sflag [#allocation3], %s371
        %s373 = sand.u32 %s266, 1
        %s374 = smul.addr %s373, 8
        %s375 = scalar_lea.vmem [#allocation2], %s374
        %p376 = scmp.lt.s32.totalorder %s28, 1
        %s377 = scalar_select %p376, %s28, 1
        %s378 = smul.addr %s377, 8
        %s379 = scalar_lea.vmem %s0, %s378
        %p380 = scmp.lt.s32.totalorder %s28, 1
        %s381 = scalar_select %p380, %s28, 1
        %s382 = scalar_lea.vmem %s1, %s381
        %v383 = vld [vmem:[%s379] sm:$0xff]
        %s384 = smul.u32 %s29, 8
        %s385 = scalar_lea.vmem %s379, %s384
        %v386 = vld [vmem:[%s385] sm:$0xff]
        %v387 = vld [vmem:[%s2] sm:$0xff]
        %v388 = vld [vmem:[%s2 + $0x8] sm:$0xff]
        %v389 = vld [vmem:[%s3] sm:$0x1]
        %v391 = vperm.slane %v389, 0
        %vm393 = vcmask 130048
        %v395 = vsel %vm393, %v386, 0
        %397 = vmatpush.msra.mxu0 0.0
        %398 = vmatpush.msra.mxu0 0.0
        %399 = vmatpush.msra.mxu0 0.0
        %400 = vmatpush.msra.mxu0 0.0
        %401 = vmatpush.msra.mxu0 0.0
        %402 = vmatpush.msra.mxu0 0.0
        %403 = vmatpush.msra.mxu0 0.0
        %404 = vmatpush.msra.mxu0 0.0
        %405 = vmatpush.msra.mxu0 0.0
        %406 = vmatpush.msra.mxu0 0.0
        %407 = vmatpush.msra.mxu0 0.0
        %408 = vmatpush.msra.mxu0 0.0
        %409 = vmatpush.msra.mxu0 0.0
        %410 = vmatpush.msra.mxu0 0.0
        %v411 = vand.u32 %v388, 4294901760
        %412 = vmatpush.msra.mxu0 %v411
        %v413 = vand.u32 %v387, 4294901760
        %414 = vmatpush.msra.mxu0 %v413
        %v415 = vand.u32 %v395, 4294901760
        %v416 = vsub.f32 %v395, %v415
        %v417 = vand.u32 %v416, 4294901760
        %v418 = vsub.f32 %v416, %v417
        %v419 = vand.u32 %v418, 4294901760
        %420 = vmatmul.f32.gmra.mxu0 %v419
        %v421 = vpop.f32.mrf.mxu0
        %v422 = vadd.f32 %v391, %v421
        %423 = vdwg.mxu0
        %424 = vmatpush.msra.mxu0 0.0
        %425 = vmatpush.msra.mxu0 0.0
        %426 = vmatpush.msra.mxu0 0.0
        %427 = vmatpush.msra.mxu0 0.0
        %428 = vmatpush.msra.mxu0 0.0
        %429 = vmatpush.msra.mxu0 0.0
        %430 = vmatpush.msra.mxu0 0.0
        %431 = vmatpush.msra.mxu0 0.0
        %432 = vmatpush.msra.mxu0 0.0
        %433 = vmatpush.msra.mxu0 0.0
        %434 = vmatpush.msra.mxu0 0.0
        %435 = vmatpush.msra.mxu0 0.0
        %436 = vmatpush.msra.mxu0 0.0
        %437 = vmatpush.msra.mxu0 0.0
        %v438 = vand.u32 %v388, 4294901760
        %v439 = vsub.f32 %v388, %v438
        %v440 = vand.u32 %v439, 4294901760
        %v441 = vsub.f32 %v439, %v440
        %v442 = vand.u32 %v441, 4294901760
        %443 = vmatpush.msra.mxu0 %v442
        %v444 = vand.u32 %v387, 4294901760
        %v445 = vsub.f32 %v387, %v444
        %v446 = vand.u32 %v445, 4294901760
        %v447 = vsub.f32 %v445, %v446
        %v448 = vand.u32 %v447, 4294901760
        %449 = vmatpush.msra.mxu0 %v448
        %v450 = vand.u32 %v395, 4294901760
        %451 = vmatmul.f32.gmra.mxu0 %v450
        %v452 = vpop.f32.mrf.mxu0
        %v453 = vadd.f32 %v422, %v452
        %454 = vdwg.mxu0
        %455 = vmatpush.msra.mxu0 0.0
        %456 = vmatpush.msra.mxu0 0.0
        %457 = vmatpush.msra.mxu0 0.0
        %458 = vmatpush.msra.mxu0 0.0
        %459 = vmatpush.msra.mxu0 0.0
        %460 = vmatpush.msra.mxu0 0.0
        %461 = vmatpush.msra.mxu0 0.0
        %462 = vmatpush.msra.mxu0 0.0
        %463 = vmatpush.msra.mxu0 0.0
        %464 = vmatpush.msra.mxu0 0.0
        %465 = vmatpush.msra.mxu0 0.0
        %466 = vmatpush.msra.mxu0 0.0
        %467 = vmatpush.msra.mxu0 0.0
        %468 = vmatpush.msra.mxu0 0.0
        %v469 = vand.u32 %v388, 4294901760
        %v470 = vsub.f32 %v388, %v469
        %471 = vmatpush.msra.mxu0 %v470
        %v472 = vand.u32 %v387, 4294901760
        %v473 = vsub.f32 %v387, %v472
        %474 = vmatpush.msra.mxu0 %v473
        %v475 = vand.u32 %v395, 4294901760
        %v476 = vsub.f32 %v395, %v475
        %477 = vmatmul.f32.gmra.mxu0 %v476
        %v478 = vpop.f32.mrf.mxu0
        %v479 = vadd.f32 %v453, %v478
        %480 = vdwg.mxu0
        %481 = vmatpush.msra.mxu0 0.0
        %482 = vmatpush.msra.mxu0 0.0
        %483 = vmatpush.msra.mxu0 0.0
        %484 = vmatpush.msra.mxu0 0.0
        %485 = vmatpush.msra.mxu0 0.0
        %486 = vmatpush.msra.mxu0 0.0
        %487 = vmatpush.msra.mxu0 0.0
        %488 = vmatpush.msra.mxu0 0.0
        %489 = vmatpush.msra.mxu0 0.0
        %490 = vmatpush.msra.mxu0 0.0
        %491 = vmatpush.msra.mxu0 0.0
        %492 = vmatpush.msra.mxu0 0.0
        %493 = vmatpush.msra.mxu0 0.0
        %494 = vmatpush.msra.mxu0 0.0
        %v495 = vand.u32 %v388, 4294901760
        %496 = vmatpush.msra.mxu0 %v495
        %v497 = vand.u32 %v387, 4294901760
        %498 = vmatpush.msra.mxu0 %v497
        %v499 = vand.u32 %v395, 4294901760
        %v500 = vsub.f32 %v395, %v499
        %v501 = vand.u32 %v500, 4294901760
        %502 = vmatmul.f32.gmra.mxu0 %v501
        %v503 = vpop.f32.mrf.mxu0
        %v504 = vadd.f32 %v479, %v503
        %505 = vdwg.mxu0
        %506 = vmatpush.msra.mxu0 0.0
        %507 = vmatpush.msra.mxu0 0.0
        %508 = vmatpush.msra.mxu0 0.0
        %509 = vmatpush.msra.mxu0 0.0
        %510 = vmatpush.msra.mxu0 0.0
        %511 = vmatpush.msra.mxu0 0.0
        %512 = vmatpush.msra.mxu0 0.0
        %513 = vmatpush.msra.mxu0 0.0
        %514 = vmatpush.msra.mxu0 0.0
        %515 = vmatpush.msra.mxu0 0.0
        %516 = vmatpush.msra.mxu0 0.0
        %517 = vmatpush.msra.mxu0 0.0
        %518 = vmatpush.msra.mxu0 0.0
        %519 = vmatpush.msra.mxu0 0.0
        %v520 = vand.u32 %v388, 4294901760
        %v521 = vsub.f32 %v388, %v520
        %v522 = vand.u32 %v521, 4294901760
        %523 = vmatpush.msra.mxu0 %v522
        %v524 = vand.u32 %v387, 4294901760
        %v525 = vsub.f32 %v387, %v524
        %v526 = vand.u32 %v525, 4294901760
        %527 = vmatpush.msra.mxu0 %v526
        %v528 = vand.u32 %v395, 4294901760
        %529 = vmatmul.f32.gmra.mxu0 %v528
        %v530 = vpop.f32.mrf.mxu0
        %v531 = vadd.f32 %v504, %v530
        %532 = vdwg.mxu0
        %533 = vmatpush.msra.mxu0 0.0
        %534 = vmatpush.msra.mxu0 0.0
        %535 = vmatpush.msra.mxu0 0.0
        %536 = vmatpush.msra.mxu0 0.0
        %537 = vmatpush.msra.mxu0 0.0
        %538 = vmatpush.msra.mxu0 0.0
        %539 = vmatpush.msra.mxu0 0.0
        %540 = vmatpush.msra.mxu0 0.0
        %541 = vmatpush.msra.mxu0 0.0
        %542 = vmatpush.msra.mxu0 0.0
        %543 = vmatpush.msra.mxu0 0.0
        %544 = vmatpush.msra.mxu0 0.0
        %545 = vmatpush.msra.mxu0 0.0
        %546 = vmatpush.msra.mxu0 0.0
        %v547 = vand.u32 %v388, 4294901760
        %548 = vmatpush.msra.mxu0 %v547
        %v549 = vand.u32 %v387, 4294901760
        %550 = vmatpush.msra.mxu0 %v549
        %v551 = vand.u32 %v395, 4294901760
        %552 = vmatmul.f32.gmra.mxu0 %v551
        %v553 = vpop.f32.mrf.mxu0
        %v554 = vadd.f32 %v531, %v553
        %555 = vdwg.mxu0
        %v556 = vld [vmem:[%s4] sm:$0xff]
        %v557 = vld [vmem:[%s4 + $0x8] sm:$0xff]
        %v558 = vld [vmem:[%s4 + $0x10] sm:$0xff]
        %v559 = vld [vmem:[%s4 + $0x18] sm:$0xff]
        %v560 = vld [vmem:[%s4 + $0x20] sm:$0xff]
        %v561 = vld [vmem:[%s4 + $0x28] sm:$0xff]
        %v562 = vld [vmem:[%s4 + $0x30] sm:$0xff]
        %v563 = vld [vmem:[%s4 + $0x38] sm:$0xff]
        %v565 = vsel %vm393, %v556, 0
        %v568 = vsel %vm393, %v557, 0
        %v571 = vsel %vm393, %v558, 0
        %v574 = vsel %vm393, %v559, 0
        %v577 = vsel %vm393, %v560, 0
        %v580 = vsel %vm393, %v561, 0
        %v583 = vsel %vm393, %v562, 0
        %v586 = vsel %vm393, %v563, 0
        %v589 = vsel %vm393, %v383, 0
        %591 = vmatpush.xpose.msra.mxu0 0.0
        %592 = vmatpush.xpose.msra.mxu0 0.0
        %593 = vmatpush.xpose.msra.mxu0 0.0
        %594 = vmatpush.xpose.msra.mxu0 0.0
        %595 = vmatpush.xpose.msra.mxu0 0.0
        %596 = vmatpush.xpose.msra.mxu0 0.0
        %597 = vmatpush.xpose.msra.mxu0 0.0
        %598 = vmatpush.xpose.msra.mxu0 0.0
        %599 = vmatpush.xpose.msra.mxu0 0.0
        %600 = vmatpush.xpose.msra.mxu0 0.0
        %601 = vmatpush.xpose.msra.mxu0 0.0
        %602 = vmatpush.xpose.msra.mxu0 0.0
        %603 = vmatpush.xpose.msra.mxu0 0.0
        %604 = vmatpush.xpose.msra.mxu0 0.0
        %605 = vmatpush.xpose.msra.mxu0 0.0
        %v606 = vand.u32 %v589, 4294901760
        %607 = vmatpush.xpose.msra.mxu0 %v606
        %v608 = vand.u32 %v565, 4294901760
        %v609 = vsub.f32 %v565, %v608
        %v610 = vand.u32 %v609, 4294901760
        %v611 = vsub.f32 %v609, %v610
        %v612 = vand.u32 %v611, 4294901760
        %613 = vmatmul.f32.gmra.mxu0 %v612
        %v614 = vpop.f32.mrf.mxu0
        %v615 = vadd.f32 0.0, %v614
        %v616 = vand.u32 %v568, 4294901760
        %v617 = vsub.f32 %v568, %v616
        %v618 = vand.u32 %v617, 4294901760
        %v619 = vsub.f32 %v617, %v618
        %v620 = vand.u32 %v619, 4294901760
        %621 = vmatmul.f32.gmra.mxu0 %v620
        %v622 = vpop.f32.mrf.mxu0
        %v623 = vadd.f32 0.0, %v622
        %v624 = vand.u32 %v571, 4294901760
        %v625 = vsub.f32 %v571, %v624
        %v626 = vand.u32 %v625, 4294901760
        %v627 = vsub.f32 %v625, %v626
        %v628 = vand.u32 %v627, 4294901760
        %629 = vmatmul.f32.gmra.mxu0 %v628
        %v630 = vpop.f32.mrf.mxu0
        %v631 = vadd.f32 0.0, %v630
        %v632 = vand.u32 %v574, 4294901760
        %v633 = vsub.f32 %v574, %v632
        %v634 = vand.u32 %v633, 4294901760
        %v635 = vsub.f32 %v633, %v634
        %v636 = vand.u32 %v635, 4294901760
        %637 = vmatmul.f32.gmra.mxu0 %v636
        %v638 = vpop.f32.mrf.mxu0
        %v639 = vadd.f32 0.0, %v638
        %v640 = vand.u32 %v577, 4294901760
        %v641 = vsub.f32 %v577, %v640
        %v642 = vand.u32 %v641, 4294901760
        %v643 = vsub.f32 %v641, %v642
        %v644 = vand.u32 %v643, 4294901760
        %645 = vmatmul.f32.gmra.mxu0 %v644
        %v646 = vpop.f32.mrf.mxu0
        %v647 = vadd.f32 0.0, %v646
        %v648 = vand.u32 %v580, 4294901760
        %v649 = vsub.f32 %v580, %v648
        %v650 = vand.u32 %v649, 4294901760
        %v651 = vsub.f32 %v649, %v650
        %v652 = vand.u32 %v651, 4294901760
        %653 = vmatmul.f32.gmra.mxu0 %v652
        %v654 = vpop.f32.mrf.mxu0
        %v655 = vadd.f32 0.0, %v654
        %v656 = vand.u32 %v583, 4294901760
        %v657 = vsub.f32 %v583, %v656
        %v658 = vand.u32 %v657, 4294901760
        %v659 = vsub.f32 %v657, %v658
        %v660 = vand.u32 %v659, 4294901760
        %661 = vmatmul.f32.gmra.mxu0 %v660
        %v662 = vpop.f32.mrf.mxu0
        %v663 = vadd.f32 0.0, %v662
        %v664 = vand.u32 %v586, 4294901760
        %v665 = vsub.f32 %v586, %v664
        %v666 = vand.u32 %v665, 4294901760
        %v667 = vsub.f32 %v665, %v666
        %v668 = vand.u32 %v667, 4294901760
        %669 = vmatmul.f32.gmra.mxu0 %v668
        %v670 = vpop.f32.mrf.mxu0
        %v671 = vadd.f32 0.0, %v670
        %672 = vdwg.mxu0
        %673 = vmatpush.xpose.msra.mxu0 0.0
        %674 = vmatpush.xpose.msra.mxu0 0.0
        %675 = vmatpush.xpose.msra.mxu0 0.0
        %676 = vmatpush.xpose.msra.mxu0 0.0
        %677 = vmatpush.xpose.msra.mxu0 0.0
        %678 = vmatpush.xpose.msra.mxu0 0.0
        %679 = vmatpush.xpose.msra.mxu0 0.0
        %680 = vmatpush.xpose.msra.mxu0 0.0
        %681 = vmatpush.xpose.msra.mxu0 0.0
        %682 = vmatpush.xpose.msra.mxu0 0.0
        %683 = vmatpush.xpose.msra.mxu0 0.0
        %684 = vmatpush.xpose.msra.mxu0 0.0
        %685 = vmatpush.xpose.msra.mxu0 0.0
        %686 = vmatpush.xpose.msra.mxu0 0.0
        %687 = vmatpush.xpose.msra.mxu0 0.0
        %v688 = vand.u32 %v589, 4294901760
        %v689 = vsub.f32 %v589, %v688
        %v690 = vand.u32 %v689, 4294901760
        %v691 = vsub.f32 %v689, %v690
        %v692 = vand.u32 %v691, 4294901760
        %693 = vmatpush.xpose.msra.mxu0 %v692
        %v694 = vand.u32 %v565, 4294901760
        %695 = vmatmul.f32.gmra.mxu0 %v694
        %v696 = vpop.f32.mrf.mxu0
        %v697 = vadd.f32 %v615, %v696
        %v698 = vand.u32 %v568, 4294901760
        %699 = vmatmul.f32.gmra.mxu0 %v698
        %v700 = vpop.f32.mrf.mxu0
        %v701 = vadd.f32 %v623, %v700
        %v702 = vand.u32 %v571, 4294901760
        %703 = vmatmul.f32.gmra.mxu0 %v702
        %v704 = vpop.f32.mrf.mxu0
        %v705 = vadd.f32 %v631, %v704
        %v706 = vand.u32 %v574, 4294901760
        %707 = vmatmul.f32.gmra.mxu0 %v706
        %v708 = vpop.f32.mrf.mxu0
        %v709 = vadd.f32 %v639, %v708
        %v710 = vand.u32 %v577, 4294901760
        %711 = vmatmul.f32.gmra.mxu0 %v710
        %v712 = vpop.f32.mrf.mxu0
        %v713 = vadd.f32 %v647, %v712
        %v714 = vand.u32 %v580, 4294901760
        %715 = vmatmul.f32.gmra.mxu0 %v714
        %v716 = vpop.f32.mrf.mxu0
        %v717 = vadd.f32 %v655, %v716
        %v718 = vand.u32 %v583, 4294901760
        %719 = vmatmul.f32.gmra.mxu0 %v718
        %v720 = vpop.f32.mrf.mxu0
        %v721 = vadd.f32 %v663, %v720
        %v722 = vand.u32 %v586, 4294901760
        %723 = vmatmul.f32.gmra.mxu0 %v722
        %v724 = vpop.f32.mrf.mxu0
        %v725 = vadd.f32 %v671, %v724
        %726 = vdwg.mxu0
        %727 = vmatpush.xpose.msra.mxu0 0.0
        %728 = vmatpush.xpose.msra.mxu0 0.0
        %729 = vmatpush.xpose.msra.mxu0 0.0
        %730 = vmatpush.xpose.msra.mxu0 0.0
        %731 = vmatpush.xpose.msra.mxu0 0.0
        %732 = vmatpush.xpose.msra.mxu0 0.0
        %733 = vmatpush.xpose.msra.mxu0 0.0
        %734 = vmatpush.xpose.msra.mxu0 0.0
        %735 = vmatpush.xpose.msra.mxu0 0.0
        %736 = vmatpush.xpose.msra.mxu0 0.0
        %737 = vmatpush.xpose.msra.mxu0 0.0
        %738 = vmatpush.xpose.msra.mxu0 0.0
        %739 = vmatpush.xpose.msra.mxu0 0.0
        %740 = vmatpush.xpose.msra.mxu0 0.0
        %741 = vmatpush.xpose.msra.mxu0 0.0
        %v742 = vand.u32 %v589, 4294901760
        %v743 = vsub.f32 %v589, %v742
        %744 = vmatpush.xpose.msra.mxu0 %v743
        %v745 = vand.u32 %v565, 4294901760
        %v746 = vsub.f32 %v565, %v745
        %747 = vmatmul.f32.gmra.mxu0 %v746
        %v748 = vpop.f32.mrf.mxu0
        %v749 = vadd.f32 %v697, %v748
        %v750 = vand.u32 %v568, 4294901760
        %v751 = vsub.f32 %v568, %v750
        %752 = vmatmul.f32.gmra.mxu0 %v751
        %v753 = vpop.f32.mrf.mxu0
        %v754 = vadd.f32 %v701, %v753
        %v755 = vand.u32 %v571, 4294901760
        %v756 = vsub.f32 %v571, %v755
        %757 = vmatmul.f32.gmra.mxu0 %v756
        %v758 = vpop.f32.mrf.mxu0
        %v759 = vadd.f32 %v705, %v758
        %v760 = vand.u32 %v574, 4294901760
        %v761 = vsub.f32 %v574, %v760
        %762 = vmatmul.f32.gmra.mxu0 %v761
        %v763 = vpop.f32.mrf.mxu0
        %v764 = vadd.f32 %v709, %v763
        %v765 = vand.u32 %v577, 4294901760
        %v766 = vsub.f32 %v577, %v765
        %767 = vmatmul.f32.gmra.mxu0 %v766
        %v768 = vpop.f32.mrf.mxu0
        %v769 = vadd.f32 %v713, %v768
        %v770 = vand.u32 %v580, 4294901760
        %v771 = vsub.f32 %v580, %v770
        %772 = vmatmul.f32.gmra.mxu0 %v771
        %v773 = vpop.f32.mrf.mxu0
        %v774 = vadd.f32 %v717, %v773
        %v775 = vand.u32 %v583, 4294901760
        %v776 = vsub.f32 %v583, %v775
        %777 = vmatmul.f32.gmra.mxu0 %v776
        %v778 = vpop.f32.mrf.mxu0
        %v779 = vadd.f32 %v721, %v778
        %v780 = vand.u32 %v586, 4294901760
        %v781 = vsub.f32 %v586, %v780
        %782 = vmatmul.f32.gmra.mxu0 %v781
        %v783 = vpop.f32.mrf.mxu0
        %v784 = vadd.f32 %v725, %v783
        %785 = vdwg.mxu0
        %786 = vmatpush.xpose.msra.mxu0 0.0
        %787 = vmatpush.xpose.msra.mxu0 0.0
        %788 = vmatpush.xpose.msra.mxu0 0.0
        %789 = vmatpush.xpose.msra.mxu0 0.0
        %790 = vmatpush.xpose.msra.mxu0 0.0
        %791 = vmatpush.xpose.msra.mxu0 0.0
        %792 = vmatpush.xpose.msra.mxu0 0.0
        %793 = vmatpush.xpose.msra.mxu0 0.0
        %794 = vmatpush.xpose.msra.mxu0 0.0
        %795 = vmatpush.xpose.msra.mxu0 0.0
        %796 = vmatpush.xpose.msra.mxu0 0.0
        %797 = vmatpush.xpose.msra.mxu0 0.0
        %798 = vmatpush.xpose.msra.mxu0 0.0
        %799 = vmatpush.xpose.msra.mxu0 0.0
        %800 = vmatpush.xpose.msra.mxu0 0.0
        %v801 = vand.u32 %v589, 4294901760
        %802 = vmatpush.xpose.msra.mxu0 %v801
        %v803 = vand.u32 %v565, 4294901760
        %v804 = vsub.f32 %v565, %v803
        %v805 = vand.u32 %v804, 4294901760
        %806 = vmatmul.f32.gmra.mxu0 %v805
        %v807 = vpop.f32.mrf.mxu0
        %v808 = vadd.f32 %v749, %v807
        %v809 = vand.u32 %v568, 4294901760
        %v810 = vsub.f32 %v568, %v809
        %v811 = vand.u32 %v810, 4294901760
        %812 = vmatmul.f32.gmra.mxu0 %v811
        %v813 = vpop.f32.mrf.mxu0
        %v814 = vadd.f32 %v754, %v813
        %v815 = vand.u32 %v571, 4294901760
        %v816 = vsub.f32 %v571, %v815
        %v817 = vand.u32 %v816, 4294901760
        %818 = vmatmul.f32.gmra.mxu0 %v817
        %v819 = vpop.f32.mrf.mxu0
        %v820 = vadd.f32 %v759, %v819
        %v821 = vand.u32 %v574, 4294901760
        %v822 = vsub.f32 %v574, %v821
        %v823 = vand.u32 %v822, 4294901760
        %824 = vmatmul.f32.gmra.mxu0 %v823
        %v825 = vpop.f32.mrf.mxu0
        %v826 = vadd.f32 %v764, %v825
        %v827 = vand.u32 %v577, 4294901760
        %v828 = vsub.f32 %v577, %v827
        %v829 = vand.u32 %v828, 4294901760
        %830 = vmatmul.f32.gmra.mxu0 %v829
        %v831 = vpop.f32.mrf.mxu0
        %v832 = vadd.f32 %v769, %v831
        %v833 = vand.u32 %v580, 4294901760
        %v834 = vsub.f32 %v580, %v833
        %v835 = vand.u32 %v834, 4294901760
        %836 = vmatmul.f32.gmra.mxu0 %v835
        %v837 = vpop.f32.mrf.mxu0
        %v838 = vadd.f32 %v774, %v837
        %v839 = vand.u32 %v583, 4294901760
        %v840 = vsub.f32 %v583, %v839
        %v841 = vand.u32 %v840, 4294901760
        %842 = vmatmul.f32.gmra.mxu0 %v841
        %v843 = vpop.f32.mrf.mxu0
        %v844 = vadd.f32 %v779, %v843
        %v845 = vand.u32 %v586, 4294901760
        %v846 = vsub.f32 %v586, %v845
        %v847 = vand.u32 %v846, 4294901760
        %848 = vmatmul.f32.gmra.mxu0 %v847
        %v849 = vpop.f32.mrf.mxu0
        %v850 = vadd.f32 %v784, %v849
        %851 = vdwg.mxu0
        %852 = vmatpush.xpose.msra.mxu0 0.0
        %853 = vmatpush.xpose.msra.mxu0 0.0
        %854 = vmatpush.xpose.msra.mxu0 0.0
        %855 = vmatpush.xpose.msra.mxu0 0.0
        %856 = vmatpush.xpose.msra.mxu0 0.0
        %857 = vmatpush.xpose.msra.mxu0 0.0
        %858 = vmatpush.xpose.msra.mxu0 0.0
        %859 = vmatpush.xpose.msra.mxu0 0.0
        %860 = vmatpush.xpose.msra.mxu0 0.0
        %861 = vmatpush.xpose.msra.mxu0 0.0
        %862 = vmatpush.xpose.msra.mxu0 0.0
        %863 = vmatpush.xpose.msra.mxu0 0.0
        %864 = vmatpush.xpose.msra.mxu0 0.0
        %865 = vmatpush.xpose.msra.mxu0 0.0
        %866 = vmatpush.xpose.msra.mxu0 0.0
        %v867 = vand.u32 %v589, 4294901760
        %v868 = vsub.f32 %v589, %v867
        %v869 = vand.u32 %v868, 4294901760
        %870 = vmatpush.xpose.msra.mxu0 %v869
        %v871 = vand.u32 %v565, 4294901760
        %872 = vmatmul.f32.gmra.mxu0 %v871
        %v873 = vpop.f32.mrf.mxu0
        %v874 = vadd.f32 %v808, %v873
        %v875 = vand.u32 %v568, 4294901760
        %876 = vmatmul.f32.gmra.mxu0 %v875
        %v877 = vpop.f32.mrf.mxu0
        %v878 = vadd.f32 %v814, %v877
        %v879 = vand.u32 %v571, 4294901760
        %880 = vmatmul.f32.gmra.mxu0 %v879
        %v881 = vpop.f32.mrf.mxu0
        %v882 = vadd.f32 %v820, %v881
        %v883 = vand.u32 %v574, 4294901760
        %884 = vmatmul.f32.gmra.mxu0 %v883
        %v885 = vpop.f32.mrf.mxu0
        %v886 = vadd.f32 %v826, %v885
        %v887 = vand.u32 %v577, 4294901760
        %888 = vmatmul.f32.gmra.mxu0 %v887
        %v889 = vpop.f32.mrf.mxu0
        %v890 = vadd.f32 %v832, %v889
        %v891 = vand.u32 %v580, 4294901760
        %892 = vmatmul.f32.gmra.mxu0 %v891
        %v893 = vpop.f32.mrf.mxu0
        %v894 = vadd.f32 %v838, %v893
        %v895 = vand.u32 %v583, 4294901760
        %896 = vmatmul.f32.gmra.mxu0 %v895
        %v897 = vpop.f32.mrf.mxu0
        %v898 = vadd.f32 %v844, %v897
        %v899 = vand.u32 %v586, 4294901760
        %900 = vmatmul.f32.gmra.mxu0 %v899
        %v901 = vpop.f32.mrf.mxu0
        %v902 = vadd.f32 %v850, %v901
        %903 = vdwg.mxu0
        %904 = vmatpush.xpose.msra.mxu0 0.0
        %905 = vmatpush.xpose.msra.mxu0 0.0
        %906 = vmatpush.xpose.msra.mxu0 0.0
        %907 = vmatpush.xpose.msra.mxu0 0.0
        %908 = vmatpush.xpose.msra.mxu0 0.0
        %909 = vmatpush.xpose.msra.mxu0 0.0
        %910 = vmatpush.xpose.msra.mxu0 0.0
        %911 = vmatpush.xpose.msra.mxu0 0.0
        %912 = vmatpush.xpose.msra.mxu0 0.0
        %913 = vmatpush.xpose.msra.mxu0 0.0
        %914 = vmatpush.xpose.msra.mxu0 0.0
        %915 = vmatpush.xpose.msra.mxu0 0.0
        %916 = vmatpush.xpose.msra.mxu0 0.0
        %917 = vmatpush.xpose.msra.mxu0 0.0
        %918 = vmatpush.xpose.msra.mxu0 0.0
        %v919 = vand.u32 %v589, 4294901760
        %920 = vmatpush.xpose.msra.mxu0 %v919
        %v921 = vand.u32 %v565, 4294901760
        %922 = vmatmul.f32.gmra.mxu0 %v921
        %v923 = vpop.f32.mrf.mxu0
        %v924 = vadd.f32 %v874, %v923
        %v925 = vand.u32 %v568, 4294901760
        %926 = vmatmul.f32.gmra.mxu0 %v925
        %v927 = vpop.f32.mrf.mxu0
        %v928 = vadd.f32 %v878, %v927
        %v929 = vand.u32 %v571, 4294901760
        %930 = vmatmul.f32.gmra.mxu0 %v929
        %v931 = vpop.f32.mrf.mxu0
        %v932 = vadd.f32 %v882, %v931
        %v933 = vand.u32 %v574, 4294901760
        %934 = vmatmul.f32.gmra.mxu0 %v933
        %v935 = vpop.f32.mrf.mxu0
        %v936 = vadd.f32 %v886, %v935
        %v937 = vand.u32 %v577, 4294901760
        %938 = vmatmul.f32.gmra.mxu0 %v937
        %v939 = vpop.f32.mrf.mxu0
        %v940 = vadd.f32 %v890, %v939
        %v941 = vand.u32 %v580, 4294901760
        %942 = vmatmul.f32.gmra.mxu0 %v941
        %v943 = vpop.f32.mrf.mxu0
        %v944 = vadd.f32 %v894, %v943
        %v945 = vand.u32 %v583, 4294901760
        %946 = vmatmul.f32.gmra.mxu0 %v945
        %v947 = vpop.f32.mrf.mxu0
        %v948 = vadd.f32 %v898, %v947
        %v949 = vand.u32 %v586, 4294901760
        %950 = vmatmul.f32.gmra.mxu0 %v949
        %v951 = vpop.f32.mrf.mxu0
        %v952 = vadd.f32 %v902, %v951
        %953 = vdwg.mxu0
        %v954 = vld [vmem:[%s9] sm:$0x1]
        %v955 = vperm.slane %v554, 0
        %v956 = vlaneseq
        %v957 = vshrl.u32 %v956, 7
        %v958 = vadd.s32 %v957, 32
        %959 = vset.pattern.permute.xlu0 %v958
        %960 = vperm.xlu0 %959, %v955
        %v961 = vpop.permute.xlu0 %960
        %v962 = vlaneseq
        %v963 = vshrl.u32 %v962, 7
        %v964 = vadd.s32 %v963, 40
        %965 = vset.pattern.permute.xlu0 %v964
        %966 = vperm.xlu0 %965, %v955
        %v967 = vpop.permute.xlu0 %966
        %v968 = vlaneseq
        %v969 = vshrl.u32 %v968, 7
        %v970 = vadd.s32 %v969, 48
        %971 = vset.pattern.permute.xlu0 %v970
        %972 = vperm.xlu0 %971, %v955
        %v973 = vpop.permute.xlu0 %972
        %v974 = vlaneseq
        %v975 = vshrl.u32 %v974, 7
        %v976 = vadd.s32 %v975, 56
        %977 = vset.pattern.permute.xlu0 %v976
        %978 = vperm.xlu0 %977, %v955
        %v979 = vpop.permute.xlu0 %978
        %v980 = vperm.slane %v554, 1
        %v981 = vlaneseq
        %v982 = vshrl.u32 %v981, 7
        %v983 = vadd.s32 %v982, 32
        %984 = vset.pattern.permute.xlu0 %v983
        %985 = vperm.xlu0 %984, %v980
        %v986 = vpop.permute.xlu0 %985
        %v987 = vlaneseq
        %v988 = vshrl.u32 %v987, 7
        %v989 = vadd.s32 %v988, 40
        %990 = vset.pattern.permute.xlu0 %v989
        %991 = vperm.xlu0 %990, %v980
        %v992 = vpop.permute.xlu0 %991
        %v993 = vlaneseq
        %v994 = vshrl.u32 %v993, 7
        %v995 = vadd.s32 %v994, 48
        %996 = vset.pattern.permute.xlu0 %v995
        %997 = vperm.xlu0 %996, %v980
        %v998 = vpop.permute.xlu0 %997
        %v999 = vlaneseq
        %v1000 = vshrl.u32 %v999, 7
        %v1001 = vadd.s32 %v1000, 56
        %1002 = vset.pattern.permute.xlu0 %v1001
        %1003 = vperm.xlu0 %1002, %v980
        %v1004 = vpop.permute.xlu0 %1003
        %v1005 = vperm.slane %v554, 2
        %v1006 = vlaneseq
        %v1007 = vshrl.u32 %v1006, 7
        %v1008 = vadd.s32 %v1007, 32
        %1009 = vset.pattern.permute.xlu0 %v1008
        %1010 = vperm.xlu0 %1009, %v1005
        %v1011 = vpop.permute.xlu0 %1010
        %v1012 = vlaneseq
        %v1013 = vshrl.u32 %v1012, 7
        %v1014 = vadd.s32 %v1013, 40
        %1015 = vset.pattern.permute.xlu0 %v1014
        %1016 = vperm.xlu0 %1015, %v1005
        %v1017 = vpop.permute.xlu0 %1016
        %v1018 = vlaneseq
        %v1019 = vshrl.u32 %v1018, 7
        %v1020 = vadd.s32 %v1019, 48
        %1021 = vset.pattern.permute.xlu0 %v1020
        %1022 = vperm.xlu0 %1021, %v1005
        %v1023 = vpop.permute.xlu0 %1022
        %v1024 = vlaneseq
        %v1025 = vshrl.u32 %v1024, 7
        %v1026 = vadd.s32 %v1025, 56
        %1027 = vset.pattern.permute.xlu0 %v1026
        %1028 = vperm.xlu0 %1027, %v1005
        %v1029 = vpop.permute.xlu0 %1028
        %v1030 = vperm.slane %v554, 3
        %v1031 = vlaneseq
        %v1032 = vshrl.u32 %v1031, 7
        %v1033 = vadd.s32 %v1032, 32
        %1034 = vset.pattern.permute.xlu0 %v1033
        %1035 = vperm.xlu0 %1034, %v1030
        %v1036 = vpop.permute.xlu0 %1035
        %v1037 = vlaneseq
        %v1038 = vshrl.u32 %v1037, 7
        %v1039 = vadd.s32 %v1038, 40
        %1040 = vset.pattern.permute.xlu0 %v1039
        %1041 = vperm.xlu0 %1040, %v1030
        %v1042 = vpop.permute.xlu0 %1041
        %v1043 = vlaneseq
        %v1044 = vshrl.u32 %v1043, 7
        %v1045 = vadd.s32 %v1044, 48
        %1046 = vset.pattern.permute.xlu0 %v1045
        %1047 = vperm.xlu0 %1046, %v1030
        %v1048 = vpop.permute.xlu0 %1047
        %v1049 = vlaneseq
        %v1050 = vshrl.u32 %v1049, 7
        %v1051 = vadd.s32 %v1050, 56
        %1052 = vset.pattern.permute.xlu0 %v1051
        %1053 = vperm.xlu0 %1052, %v1030
        %v1054 = vpop.permute.xlu0 %1053
        %v1055 = vperm.slane %v554, 4
        %v1056 = vlaneseq
        %v1057 = vshrl.u32 %v1056, 7
        %v1058 = vadd.s32 %v1057, 32
        %1059 = vset.pattern.permute.xlu0 %v1058
        %1060 = vperm.xlu0 %1059, %v1055
        %v1061 = vpop.permute.xlu0 %1060
        %v1062 = vlaneseq
        %v1063 = vshrl.u32 %v1062, 7
        %v1064 = vadd.s32 %v1063, 40
        %1065 = vset.pattern.permute.xlu0 %v1064
        %1066 = vperm.xlu0 %1065, %v1055
        %v1067 = vpop.permute.xlu0 %1066
        %v1068 = vlaneseq
        %v1069 = vshrl.u32 %v1068, 7
        %v1070 = vadd.s32 %v1069, 48
        %1071 = vset.pattern.permute.xlu0 %v1070
        %1072 = vperm.xlu0 %1071, %v1055
        %v1073 = vpop.permute.xlu0 %1072
        %v1074 = vlaneseq
        %v1075 = vshrl.u32 %v1074, 7
        %v1076 = vadd.s32 %v1075, 56
        %1077 = vset.pattern.permute.xlu0 %v1076
        %1078 = vperm.xlu0 %1077, %v1055
        %v1079 = vpop.permute.xlu0 %1078
        %v1080 = vperm.slane %v554, 5
        %v1081 = vlaneseq
        %v1082 = vshrl.u32 %v1081, 7
        %v1083 = vadd.s32 %v1082, 32
        %1084 = vset.pattern.permute.xlu0 %v1083
        %1085 = vperm.xlu0 %1084, %v1080
        %v1086 = vpop.permute.xlu0 %1085
        %v1087 = vlaneseq
        %v1088 = vshrl.u32 %v1087, 7
        %v1089 = vadd.s32 %v1088, 40
        %1090 = vset.pattern.permute.xlu0 %v1089
        %1091 = vperm.xlu0 %1090, %v1080
        %v1092 = vpop.permute.xlu0 %1091
        %v1093 = vlaneseq
        %v1094 = vshrl.u32 %v1093, 7
        %v1095 = vadd.s32 %v1094, 48
        %1096 = vset.pattern.permute.xlu0 %v1095
        %1097 = vperm.xlu0 %1096, %v1080
        %v1098 = vpop.permute.xlu0 %1097
        %v1099 = vlaneseq
        %v1100 = vshrl.u32 %v1099, 7
        %v1101 = vadd.s32 %v1100, 56
        %1102 = vset.pattern.permute.xlu0 %v1101
        %1103 = vperm.xlu0 %1102, %v1080
        %v1104 = vpop.permute.xlu0 %1103
        %v1105 = vperm.slane %v554, 6
        %v1106 = vlaneseq
        %v1107 = vshrl.u32 %v1106, 7
        %v1108 = vadd.s32 %v1107, 32
        %1109 = vset.pattern.permute.xlu0 %v1108
        %1110 = vperm.xlu0 %1109, %v1105
        %v1111 = vpop.permute.xlu0 %1110
        %v1112 = vlaneseq
        %v1113 = vshrl.u32 %v1112, 7
        %v1114 = vadd.s32 %v1113, 40
        %1115 = vset.pattern.permute.xlu0 %v1114
        %1116 = vperm.xlu0 %1115, %v1105
        %v1117 = vpop.permute.xlu0 %1116
        %v1118 = vlaneseq
        %v1119 = vshrl.u32 %v1118, 7
        %v1120 = vadd.s32 %v1119, 48
        %1121 = vset.pattern.permute.xlu0 %v1120
        %1122 = vperm.xlu0 %1121, %v1105
        %v1123 = vpop.permute.xlu0 %1122
        %v1124 = vlaneseq
        %v1125 = vshrl.u32 %v1124, 7
        %v1126 = vadd.s32 %v1125, 56
        %1127 = vset.pattern.permute.xlu0 %v1126
        %1128 = vperm.xlu0 %1127, %v1105
        %v1129 = vpop.permute.xlu0 %1128
        %v1130 = vperm.slane %v554, 7
        %v1131 = vlaneseq
        %v1132 = vshrl.u32 %v1131, 7
        %v1133 = vadd.s32 %v1132, 32
        %1134 = vset.pattern.permute.xlu0 %v1133
        %1135 = vperm.xlu0 %1134, %v1130
        %v1136 = vpop.permute.xlu0 %1135
        %v1137 = vlaneseq
        %v1138 = vshrl.u32 %v1137, 7
        %v1139 = vadd.s32 %v1138, 40
        %1140 = vset.pattern.permute.xlu0 %v1139
        %1141 = vperm.xlu0 %1140, %v1130
        %v1142 = vpop.permute.xlu0 %1141
        %v1143 = vlaneseq
        %v1144 = vshrl.u32 %v1143, 7
        %v1145 = vadd.s32 %v1144, 48
        %1146 = vset.pattern.permute.xlu0 %v1145
        %1147 = vperm.xlu0 %1146, %v1130
        %v1148 = vpop.permute.xlu0 %1147
        %v1149 = vlaneseq
        %v1150 = vshrl.u32 %v1149, 7
        %v1151 = vadd.s32 %v1150, 56
        %1152 = vset.pattern.permute.xlu0 %v1151
        %1153 = vperm.xlu0 %1152, %v1130
        %v1154 = vpop.permute.xlu0 %1153
        %v1155 = vadd.f32 %v961, %v940
        %v1156 = vadd.f32 %v967, %v944
        %v1157 = vadd.f32 %v973, %v948
        %v1158 = vadd.f32 %v979, %v952
        %v1159 = vadd.f32 %v986, %v940
        %v1160 = vadd.f32 %v992, %v944
        %v1161 = vadd.f32 %v998, %v948
        %v1162 = vadd.f32 %v1004, %v952
        %v1163 = vadd.f32 %v1011, %v940
        %v1164 = vadd.f32 %v1017, %v944
        %v1165 = vadd.f32 %v1023, %v948
        %v1166 = vadd.f32 %v1029, %v952
        %v1167 = vadd.f32 %v1036, %v940
        %v1168 = vadd.f32 %v1042, %v944
        %v1169 = vadd.f32 %v1048, %v948
        %v1170 = vadd.f32 %v1054, %v952
        %v1171 = vadd.f32 %v1061, %v940
        %v1172 = vadd.f32 %v1067, %v944
        %v1173 = vadd.f32 %v1073, %v948
        %v1174 = vadd.f32 %v1079, %v952
        %v1175 = vadd.f32 %v1086, %v940
        %v1176 = vadd.f32 %v1092, %v944
        %v1177 = vadd.f32 %v1098, %v948
        %v1178 = vadd.f32 %v1104, %v952
        %v1179 = vadd.f32 %v1111, %v940
        %v1180 = vadd.f32 %v1117, %v944
        %v1181 = vadd.f32 %v1123, %v948
        %v1182 = vadd.f32 %v1129, %v952
        %v1183 = vadd.f32 %v1136, %v940
        %v1184 = vadd.f32 %v1142, %v944
        %v1185 = vadd.f32 %v1148, %v948
        %v1186 = vadd.f32 %v1154, %v952
        %v1187 = vmax.f32 %v1155, 0.0
        %v1188 = vmax.f32 %v1156, 0.0
        %v1189 = vmax.f32 %v1157, 0.0
        %v1190 = vmax.f32 %v1158, 0.0
        %v1191 = vmax.f32 %v1159, 0.0
        %v1192 = vmax.f32 %v1160, 0.0
        %v1193 = vmax.f32 %v1161, 0.0
        %v1194 = vmax.f32 %v1162, 0.0
        %v1195 = vmax.f32 %v1163, 0.0
        %v1196 = vmax.f32 %v1164, 0.0
        %v1197 = vmax.f32 %v1165, 0.0
        %v1198 = vmax.f32 %v1166, 0.0
        %v1199 = vmax.f32 %v1167, 0.0
        %v1200 = vmax.f32 %v1168, 0.0
        %v1201 = vmax.f32 %v1169, 0.0
        %v1202 = vmax.f32 %v1170, 0.0
        %v1203 = vmax.f32 %v1171, 0.0
        %v1204 = vmax.f32 %v1172, 0.0
        %v1205 = vmax.f32 %v1173, 0.0
        %v1206 = vmax.f32 %v1174, 0.0
        %v1207 = vmax.f32 %v1175, 0.0
        %v1208 = vmax.f32 %v1176, 0.0
        %v1209 = vmax.f32 %v1177, 0.0
        %v1210 = vmax.f32 %v1178, 0.0
        %v1211 = vmax.f32 %v1179, 0.0
        %v1212 = vmax.f32 %v1180, 0.0
        %v1213 = vmax.f32 %v1181, 0.0
        %v1214 = vmax.f32 %v1182, 0.0
        %v1215 = vmax.f32 %v1183, 0.0
        %v1216 = vmax.f32 %v1184, 0.0
        %v1217 = vmax.f32 %v1185, 0.0
        %v1218 = vmax.f32 %v1186, 0.0
        %v1219 = vld [vmem:[%s5] sm:$0x1]
        %v1220 = vperm.slane %v1219, 0
        %v1221 = vlaneseq
        %v1222 = vshrl.u32 %v1221, 7
        %1224 = vset.pattern.permute.xlu0 %v1222
        %1225 = vperm.xlu0 %1224, %v1220
        %v1226 = vpop.permute.xlu0 %1225
        %v1227 = vlaneseq
        %v1228 = vshrl.u32 %v1227, 7
        %v1229 = vadd.s32 %v1228, 8
        %1230 = vset.pattern.permute.xlu0 %v1229
        %1231 = vperm.xlu0 %1230, %v1220
        %v1232 = vpop.permute.xlu0 %1231
        %v1233 = vlaneseq
        %v1234 = vshrl.u32 %v1233, 7
        %v1235 = vadd.s32 %v1234, 16
        %1236 = vset.pattern.permute.xlu0 %v1235
        %1237 = vperm.xlu0 %1236, %v1220
        %v1238 = vpop.permute.xlu0 %1237
        %v1239 = vlaneseq
        %v1240 = vshrl.u32 %v1239, 7
        %v1241 = vadd.s32 %v1240, 24
        %1242 = vset.pattern.permute.xlu0 %v1241
        %1243 = vperm.xlu0 %1242, %v1220
        %v1244 = vpop.permute.xlu0 %1243
        %v1245 = vmul.f32 %v1187, %v1226
        %v1246 = vmul.f32 %v1188, %v1232
        %v1247 = vmul.f32 %v1189, %v1238
        %v1248 = vmul.f32 %v1190, %v1244
        %v1249 = vmul.f32 %v1191, %v1226
        %v1250 = vmul.f32 %v1192, %v1232
        %v1251 = vmul.f32 %v1193, %v1238
        %v1252 = vmul.f32 %v1194, %v1244
        %v1253 = vmul.f32 %v1195, %v1226
        %v1254 = vmul.f32 %v1196, %v1232
        %v1255 = vmul.f32 %v1197, %v1238
        %v1256 = vmul.f32 %v1198, %v1244
        %v1257 = vmul.f32 %v1199, %v1226
        %v1258 = vmul.f32 %v1200, %v1232
        %v1259 = vmul.f32 %v1201, %v1238
        %v1260 = vmul.f32 %v1202, %v1244
        %v1261 = vmul.f32 %v1203, %v1226
        %v1262 = vmul.f32 %v1204, %v1232
        %v1263 = vmul.f32 %v1205, %v1238
        %v1264 = vmul.f32 %v1206, %v1244
        %v1265 = vmul.f32 %v1207, %v1226
        %v1266 = vmul.f32 %v1208, %v1232
        %v1267 = vmul.f32 %v1209, %v1238
        %v1268 = vmul.f32 %v1210, %v1244
        %v1269 = vmul.f32 %v1211, %v1226
        %v1270 = vmul.f32 %v1212, %v1232
        %v1271 = vmul.f32 %v1213, %v1238
        %v1272 = vmul.f32 %v1214, %v1244
        %v1273 = vmul.f32 %v1215, %v1226
        %v1274 = vmul.f32 %v1216, %v1232
        %v1275 = vmul.f32 %v1217, %v1238
        %v1276 = vmul.f32 %v1218, %v1244
        %vm1277 = vcmask 64512
        %v1278 = vsel %vm1277, %v1245, 0.0
        %v1279 = vsel %vm1277, %v1246, 0.0
        %v1280 = vadd.f32 %v1278, %v1279
        %v1281 = vsel %vm1277, %v1247, 0.0
        %v1282 = vadd.f32 %v1280, %v1281
        %v1283 = vsel %vm1277, %v1248, 0.0
        %v1284 = vadd.f32 %v1282, %v1283
        %v1285 = vrot.slane %v1284, 4
        %v1286 = vadd.f32 %v1284, %v1285
        %v1287 = vrot.slane %v1286, 2
        %v1288 = vadd.f32 %v1286, %v1287
        %v1289 = vrot.slane %v1288, 1
        %v1290 = vadd.f32 %v1288, %v1289
        %v1291 = vsel %vm1277, %v1249, 0.0
        %v1292 = vsel %vm1277, %v1250, 0.0
        %v1293 = vadd.f32 %v1291, %v1292
        %v1294 = vsel %vm1277, %v1251, 0.0
        %v1295 = vadd.f32 %v1293, %v1294
        %v1296 = vsel %vm1277, %v1252, 0.0
        %v1297 = vadd.f32 %v1295, %v1296
        %v1298 = vrot.slane %v1297, 4
        %v1299 = vadd.f32 %v1297, %v1298
        %v1300 = vrot.slane %v1299, 2
        %v1301 = vadd.f32 %v1299, %v1300
        %v1302 = vrot.slane %v1301, 1
        %v1303 = vadd.f32 %v1301, %v1302
        %v1304 = vsel %vm1277, %v1253, 0.0
        %v1305 = vsel %vm1277, %v1254, 0.0
        %v1306 = vadd.f32 %v1304, %v1305
        %v1307 = vsel %vm1277, %v1255, 0.0
        %v1308 = vadd.f32 %v1306, %v1307
        %v1309 = vsel %vm1277, %v1256, 0.0
        %v1310 = vadd.f32 %v1308, %v1309
        %v1311 = vrot.slane %v1310, 4
        %v1312 = vadd.f32 %v1310, %v1311
        %v1313 = vrot.slane %v1312, 2
        %v1314 = vadd.f32 %v1312, %v1313
        %v1315 = vrot.slane %v1314, 1
        %v1316 = vadd.f32 %v1314, %v1315
        %v1317 = vsel %vm1277, %v1257, 0.0
        %v1318 = vsel %vm1277, %v1258, 0.0
        %v1319 = vadd.f32 %v1317, %v1318
        %v1320 = vsel %vm1277, %v1259, 0.0
        %v1321 = vadd.f32 %v1319, %v1320
        %v1322 = vsel %vm1277, %v1260, 0.0
        %v1323 = vadd.f32 %v1321, %v1322
        %v1324 = vrot.slane %v1323, 4
        %v1325 = vadd.f32 %v1323, %v1324
        %v1326 = vrot.slane %v1325, 2
        %v1327 = vadd.f32 %v1325, %v1326
        %v1328 = vrot.slane %v1327, 1
        %v1329 = vadd.f32 %v1327, %v1328
        %v1330 = vsel %vm1277, %v1261, 0.0
        %v1331 = vsel %vm1277, %v1262, 0.0
        %v1332 = vadd.f32 %v1330, %v1331
        %v1333 = vsel %vm1277, %v1263, 0.0
        %v1334 = vadd.f32 %v1332, %v1333
        %v1335 = vsel %vm1277, %v1264, 0.0
        %v1336 = vadd.f32 %v1334, %v1335
        %v1337 = vrot.slane %v1336, 4
        %v1338 = vadd.f32 %v1336, %v1337
        %v1339 = vrot.slane %v1338, 2
        %v1340 = vadd.f32 %v1338, %v1339
        %v1341 = vrot.slane %v1340, 1
        %v1342 = vadd.f32 %v1340, %v1341
        %v1343 = vsel %vm1277, %v1265, 0.0
        %v1344 = vsel %vm1277, %v1266, 0.0
        %v1345 = vadd.f32 %v1343, %v1344
        %v1346 = vsel %vm1277, %v1267, 0.0
        %v1347 = vadd.f32 %v1345, %v1346
        %v1348 = vsel %vm1277, %v1268, 0.0
        %v1349 = vadd.f32 %v1347, %v1348
        %v1350 = vrot.slane %v1349, 4
        %v1351 = vadd.f32 %v1349, %v1350
        %v1352 = vrot.slane %v1351, 2
        %v1353 = vadd.f32 %v1351, %v1352
        %v1354 = vrot.slane %v1353, 1
        %v1355 = vadd.f32 %v1353, %v1354
        %v1356 = vsel %vm1277, %v1269, 0.0
        %v1357 = vsel %vm1277, %v1270, 0.0
        %v1358 = vadd.f32 %v1356, %v1357
        %v1359 = vsel %vm1277, %v1271, 0.0
        %v1360 = vadd.f32 %v1358, %v1359
        %v1361 = vsel %vm1277, %v1272, 0.0
        %v1362 = vadd.f32 %v1360, %v1361
        %v1363 = vrot.slane %v1362, 4
        %v1364 = vadd.f32 %v1362, %v1363
        %v1365 = vrot.slane %v1364, 2
        %v1366 = vadd.f32 %v1364, %v1365
        %v1367 = vrot.slane %v1366, 1
        %v1368 = vadd.f32 %v1366, %v1367
        %v1369 = vsel %vm1277, %v1273, 0.0
        %v1370 = vsel %vm1277, %v1274, 0.0
        %v1371 = vadd.f32 %v1369, %v1370
        %v1372 = vsel %vm1277, %v1275, 0.0
        %v1373 = vadd.f32 %v1371, %v1372
        %v1374 = vsel %vm1277, %v1276, 0.0
        %v1375 = vadd.f32 %v1373, %v1374
        %v1376 = vrot.slane %v1375, 4
        %v1377 = vadd.f32 %v1375, %v1376
        %v1378 = vrot.slane %v1377, 2
        %v1379 = vadd.f32 %v1377, %v1378
        %v1380 = vrot.slane %v1379, 1
        %v1381 = vadd.f32 %v1379, %v1380
        %v1383 = vperm.slane %v954, 0
        %1384 = vset.pattern.permute.xlu0 32
        %1385 = vperm.xlu0 %1384, %v1383
        %v1386 = vpop.permute.xlu0 %1385
        %v1388 = vadd.f32 %v1290, %v1386
        %v1389 = vadd.f32 %v1303, %v1386
        %v1390 = vadd.f32 %v1316, %v1386
        %v1391 = vadd.f32 %v1329, %v1386
        %v1392 = vadd.f32 %v1342, %v1386
        %v1393 = vadd.f32 %v1355, %v1386
        %v1394 = vadd.f32 %v1368, %v1386
        %v1395 = vadd.f32 %v1381, %v1386
        %v1396 = vld [vmem:[%s382] sm:$0x1]
        %vm1397 = vcmp.gt.f32.partialorder %v1396, 0.5
        %v1398 = vsel %vm1397, 1, 0
        %v1399 = vperm.slane %v1398, 0
        %vm1400 = vcmp.eq.s32.totalorder %v1399, 1
        %vm1409 = vcmask 1041409
        %v1410 = vsel %vm1409, %v1389, %v1388
        %vm1411 = vcmask 1042434
        %v1412 = vsel %vm1411, %v1390, %v1410
        %vm1413 = vcmask 1043459
        %v1414 = vsel %vm1413, %v1391, %v1412
        %vm1415 = vcmask 1044484
        %v1416 = vsel %vm1415, %v1392, %v1414
        %vm1417 = vcmask 1045509
        %v1418 = vsel %vm1417, %v1393, %v1416
        %vm1419 = vcmask 1046534
        %v1420 = vsel %vm1419, %v1394, %v1418
        %vm1421 = vcmask 1047559
        %v1422 = vsel %vm1421, %v1395, %v1420
        %v1424 = vsel %vm1400, %v1422, -1e+30
        %v1425 = vsel %vm1277, %v1424, -inf
        %1426 = vmax.xlane.f32.xlu0 %v1425
        %v1427 = vpop.xlane.xlu0 %1426
        %v1428 = vsub.f32 %v1424, %v1427
        %v1429 = vmul.f32 %v1428, 1.442695
        %v1430 = vpow.pop %v1429
        %v1431 = vsel %vm1400, %v1430, 0.0
        %v1432 = vsel %vm1277, %v1431, 0.0
        %1433 = vadd.xlane.f32.xlu0 %v1432
        %v1434 = vpop.xlane.xlu0 %1433
        %vm1435 = vcmp.gt.f32.partialorder %v1434, 0.0
        %v1436 = vsel %vm1435, %v1434, 1.0
        %v1437 = vrcp.pop %v1436
        %v1438 = vmul.f32 %v1436, %v1437
        %v1439 = vsub.f32 1.0, %v1438
        %v1440 = vmul.f32 %v1437, %v1439
        %v1441 = vadd.f32 %v1437, %v1440
        %vm1442 = vweird.f32 %v1436
        %vm1443 = vweird.f32 %v1437
        %vm1444 = vmor %vm1442, %vm1443
        %v1445 = vsel %vm1444, %v1437, %v1441
        %v1446 = vand.u32 2147483647, %v1436
        %vm1447 = vcmp.eq.f32.partialorder %v1446, 8.507059e+37
        %v1448 = vand.u32 %v1436, 2147483648
        %v1449 = vor.u32 1.1754944e-38, %v1448
        %v1450 = vsel %vm1447, %v1449, %v1445
        %v1451 = vlaneseq
        %v1452 = vshrl.u32 %v1451, 7
        %1454 = vset.pattern.permute.xlu0 %v1452
        %1455 = vperm.xlu0 %1454, %v955
        %v1456 = vpop.permute.xlu0 %1455
        %v1457 = vlaneseq
        %v1458 = vshrl.u32 %v1457, 7
        %v1459 = vadd.s32 %v1458, 8
        %1460 = vset.pattern.permute.xlu0 %v1459
        %1461 = vperm.xlu0 %1460, %v955
        %v1462 = vpop.permute.xlu0 %1461
        %v1463 = vlaneseq
        %v1464 = vshrl.u32 %v1463, 7
        %v1465 = vadd.s32 %v1464, 16
        %1466 = vset.pattern.permute.xlu0 %v1465
        %1467 = vperm.xlu0 %1466, %v955
        %v1468 = vpop.permute.xlu0 %1467
        %v1469 = vlaneseq
        %v1470 = vshrl.u32 %v1469, 7
        %v1471 = vadd.s32 %v1470, 24
        %1472 = vset.pattern.permute.xlu0 %v1471
        %1473 = vperm.xlu0 %1472, %v955
        %v1474 = vpop.permute.xlu0 %1473
        %v1475 = vlaneseq
        %v1476 = vshrl.u32 %v1475, 7
        %1478 = vset.pattern.permute.xlu0 %v1476
        %1479 = vperm.xlu0 %1478, %v980
        %v1480 = vpop.permute.xlu0 %1479
        %v1481 = vlaneseq
        %v1482 = vshrl.u32 %v1481, 7
        %v1483 = vadd.s32 %v1482, 8
        %1484 = vset.pattern.permute.xlu0 %v1483
        %1485 = vperm.xlu0 %1484, %v980
        %v1486 = vpop.permute.xlu0 %1485
        %v1487 = vlaneseq
        %v1488 = vshrl.u32 %v1487, 7
        %v1489 = vadd.s32 %v1488, 16
        %1490 = vset.pattern.permute.xlu0 %v1489
        %1491 = vperm.xlu0 %1490, %v980
        %v1492 = vpop.permute.xlu0 %1491
        %v1493 = vlaneseq
        %v1494 = vshrl.u32 %v1493, 7
        %v1495 = vadd.s32 %v1494, 24
        %1496 = vset.pattern.permute.xlu0 %v1495
        %1497 = vperm.xlu0 %1496, %v980
        %v1498 = vpop.permute.xlu0 %1497
        %v1499 = vlaneseq
        %v1500 = vshrl.u32 %v1499, 7
        %1502 = vset.pattern.permute.xlu0 %v1500
        %1503 = vperm.xlu0 %1502, %v1005
        %v1504 = vpop.permute.xlu0 %1503
        %v1505 = vlaneseq
        %v1506 = vshrl.u32 %v1505, 7
        %v1507 = vadd.s32 %v1506, 8
        %1508 = vset.pattern.permute.xlu0 %v1507
        %1509 = vperm.xlu0 %1508, %v1005
        %v1510 = vpop.permute.xlu0 %1509
        %v1511 = vlaneseq
        %v1512 = vshrl.u32 %v1511, 7
        %v1513 = vadd.s32 %v1512, 16
        %1514 = vset.pattern.permute.xlu0 %v1513
        %1515 = vperm.xlu0 %1514, %v1005
        %v1516 = vpop.permute.xlu0 %1515
        %v1517 = vlaneseq
        %v1518 = vshrl.u32 %v1517, 7
        %v1519 = vadd.s32 %v1518, 24
        %1520 = vset.pattern.permute.xlu0 %v1519
        %1521 = vperm.xlu0 %1520, %v1005
        %v1522 = vpop.permute.xlu0 %1521
        %v1523 = vlaneseq
        %v1524 = vshrl.u32 %v1523, 7
        %1526 = vset.pattern.permute.xlu0 %v1524
        %1527 = vperm.xlu0 %1526, %v1030
        %v1528 = vpop.permute.xlu0 %1527
        %v1529 = vlaneseq
        %v1530 = vshrl.u32 %v1529, 7
        %v1531 = vadd.s32 %v1530, 8
        %1532 = vset.pattern.permute.xlu0 %v1531
        %1533 = vperm.xlu0 %1532, %v1030
        %v1534 = vpop.permute.xlu0 %1533
        %v1535 = vlaneseq
        %v1536 = vshrl.u32 %v1535, 7
        %v1537 = vadd.s32 %v1536, 16
        %1538 = vset.pattern.permute.xlu0 %v1537
        %1539 = vperm.xlu0 %1538, %v1030
        %v1540 = vpop.permute.xlu0 %1539
        %v1541 = vlaneseq
        %v1542 = vshrl.u32 %v1541, 7
        %v1543 = vadd.s32 %v1542, 24
        %1544 = vset.pattern.permute.xlu0 %v1543
        %1545 = vperm.xlu0 %1544, %v1030
        %v1546 = vpop.permute.xlu0 %1545
        %v1547 = vlaneseq
        %v1548 = vshrl.u32 %v1547, 7
        %1550 = vset.pattern.permute.xlu0 %v1548
        %1551 = vperm.xlu0 %1550, %v1055
        %v1552 = vpop.permute.xlu0 %1551
        %v1553 = vlaneseq
        %v1554 = vshrl.u32 %v1553, 7
        %v1555 = vadd.s32 %v1554, 8
        %1556 = vset.pattern.permute.xlu0 %v1555
        %1557 = vperm.xlu0 %1556, %v1055
        %v1558 = vpop.permute.xlu0 %1557
        %v1559 = vlaneseq
        %v1560 = vshrl.u32 %v1559, 7
        %v1561 = vadd.s32 %v1560, 16
        %1562 = vset.pattern.permute.xlu0 %v1561
        %1563 = vperm.xlu0 %1562, %v1055
        %v1564 = vpop.permute.xlu0 %1563
        %v1565 = vlaneseq
        %v1566 = vshrl.u32 %v1565, 7
        %v1567 = vadd.s32 %v1566, 24
        %1568 = vset.pattern.permute.xlu0 %v1567
        %1569 = vperm.xlu0 %1568, %v1055
        %v1570 = vpop.permute.xlu0 %1569
        %v1571 = vlaneseq
        %v1572 = vshrl.u32 %v1571, 7
        %1574 = vset.pattern.permute.xlu0 %v1572
        %1575 = vperm.xlu0 %1574, %v1080
        %v1576 = vpop.permute.xlu0 %1575
        %v1577 = vlaneseq
        %v1578 = vshrl.u32 %v1577, 7
        %v1579 = vadd.s32 %v1578, 8
        %1580 = vset.pattern.permute.xlu0 %v1579
        %1581 = vperm.xlu0 %1580, %v1080
        %v1582 = vpop.permute.xlu0 %1581
        %v1583 = vlaneseq
        %v1584 = vshrl.u32 %v1583, 7
        %v1585 = vadd.s32 %v1584, 16
        %1586 = vset.pattern.permute.xlu0 %v1585
        %1587 = vperm.xlu0 %1586, %v1080
        %v1588 = vpop.permute.xlu0 %1587
        %v1589 = vlaneseq
        %v1590 = vshrl.u32 %v1589, 7
        %v1591 = vadd.s32 %v1590, 24
        %1592 = vset.pattern.permute.xlu0 %v1591
        %1593 = vperm.xlu0 %1592, %v1080
        %v1594 = vpop.permute.xlu0 %1593
        %v1595 = vlaneseq
        %v1596 = vshrl.u32 %v1595, 7
        %1598 = vset.pattern.permute.xlu0 %v1596
        %1599 = vperm.xlu0 %1598, %v1105
        %v1600 = vpop.permute.xlu0 %1599
        %v1601 = vlaneseq
        %v1602 = vshrl.u32 %v1601, 7
        %v1603 = vadd.s32 %v1602, 8
        %1604 = vset.pattern.permute.xlu0 %v1603
        %1605 = vperm.xlu0 %1604, %v1105
        %v1606 = vpop.permute.xlu0 %1605
        %v1607 = vlaneseq
        %v1608 = vshrl.u32 %v1607, 7
        %v1609 = vadd.s32 %v1608, 16
        %1610 = vset.pattern.permute.xlu0 %v1609
        %1611 = vperm.xlu0 %1610, %v1105
        %v1612 = vpop.permute.xlu0 %1611
        %v1613 = vlaneseq
        %v1614 = vshrl.u32 %v1613, 7
        %v1615 = vadd.s32 %v1614, 24
        %1616 = vset.pattern.permute.xlu0 %v1615
        %1617 = vperm.xlu0 %1616, %v1105
        %v1618 = vpop.permute.xlu0 %1617
        %v1619 = vlaneseq
        %v1620 = vshrl.u32 %v1619, 7
        %1622 = vset.pattern.permute.xlu0 %v1620
        %1623 = vperm.xlu0 %1622, %v1130
        %v1624 = vpop.permute.xlu0 %1623
        %v1625 = vlaneseq
        %v1626 = vshrl.u32 %v1625, 7
        %v1627 = vadd.s32 %v1626, 8
        %1628 = vset.pattern.permute.xlu0 %v1627
        %1629 = vperm.xlu0 %1628, %v1130
        %v1630 = vpop.permute.xlu0 %1629
        %v1631 = vlaneseq
        %v1632 = vshrl.u32 %v1631, 7
        %v1633 = vadd.s32 %v1632, 16
        %1634 = vset.pattern.permute.xlu0 %v1633
        %1635 = vperm.xlu0 %1634, %v1130
        %v1636 = vpop.permute.xlu0 %1635
        %v1637 = vlaneseq
        %v1638 = vshrl.u32 %v1637, 7
        %v1639 = vadd.s32 %v1638, 24
        %1640 = vset.pattern.permute.xlu0 %v1639
        %1641 = vperm.xlu0 %1640, %v1130
        %v1642 = vpop.permute.xlu0 %1641
        %v1643 = vadd.f32 %v1456, %v924
        %v1644 = vadd.f32 %v1462, %v928
        %v1645 = vadd.f32 %v1468, %v932
        %v1646 = vadd.f32 %v1474, %v936
        %v1647 = vadd.f32 %v1480, %v924
        %v1648 = vadd.f32 %v1486, %v928
        %v1649 = vadd.f32 %v1492, %v932
        %v1650 = vadd.f32 %v1498, %v936
        %v1651 = vadd.f32 %v1504, %v924
        %v1652 = vadd.f32 %v1510, %v928
        %v1653 = vadd.f32 %v1516, %v932
        %v1654 = vadd.f32 %v1522, %v936
        %v1655 = vadd.f32 %v1528, %v924
        %v1656 = vadd.f32 %v1534, %v928
        %v1657 = vadd.f32 %v1540, %v932
        %v1658 = vadd.f32 %v1546, %v936
        %v1659 = vadd.f32 %v1552, %v924
        %v1660 = vadd.f32 %v1558, %v928
        %v1661 = vadd.f32 %v1564, %v932
        %v1662 = vadd.f32 %v1570, %v936
        %v1663 = vadd.f32 %v1576, %v924
        %v1664 = vadd.f32 %v1582, %v928
        %v1665 = vadd.f32 %v1588, %v932
        %v1666 = vadd.f32 %v1594, %v936
        %v1667 = vadd.f32 %v1600, %v924
        %v1668 = vadd.f32 %v1606, %v928
        %v1669 = vadd.f32 %v1612, %v932
        %v1670 = vadd.f32 %v1618, %v936
        %v1671 = vadd.f32 %v1624, %v924
        %v1672 = vadd.f32 %v1630, %v928
        %v1673 = vadd.f32 %v1636, %v932
        %v1674 = vadd.f32 %v1642, %v936
        %v1675 = vmax.f32 %v1643, 0.0
        %v1676 = vmax.f32 %v1644, 0.0
        %v1677 = vmax.f32 %v1645, 0.0
        %v1678 = vmax.f32 %v1646, 0.0
        %v1679 = vmax.f32 %v1647, 0.0
        %v1680 = vmax.f32 %v1648, 0.0
        %v1681 = vmax.f32 %v1649, 0.0
        %v1682 = vmax.f32 %v1650, 0.0
        %v1683 = vmax.f32 %v1651, 0.0
        %v1684 = vmax.f32 %v1652, 0.0
        %v1685 = vmax.f32 %v1653, 0.0
        %v1686 = vmax.f32 %v1654, 0.0
        %v1687 = vmax.f32 %v1655, 0.0
        %v1688 = vmax.f32 %v1656, 0.0
        %v1689 = vmax.f32 %v1657, 0.0
        %v1690 = vmax.f32 %v1658, 0.0
        %v1691 = vmax.f32 %v1659, 0.0
        %v1692 = vmax.f32 %v1660, 0.0
        %v1693 = vmax.f32 %v1661, 0.0
        %v1694 = vmax.f32 %v1662, 0.0
        %v1695 = vmax.f32 %v1663, 0.0
        %v1696 = vmax.f32 %v1664, 0.0
        %v1697 = vmax.f32 %v1665, 0.0
        %v1698 = vmax.f32 %v1666, 0.0
        %v1699 = vmax.f32 %v1667, 0.0
        %v1700 = vmax.f32 %v1668, 0.0
        %v1701 = vmax.f32 %v1669, 0.0
        %v1702 = vmax.f32 %v1670, 0.0
        %v1703 = vmax.f32 %v1671, 0.0
        %v1704 = vmax.f32 %v1672, 0.0
        %v1705 = vmax.f32 %v1673, 0.0
        %v1706 = vmax.f32 %v1674, 0.0
        %v1708 = vrot.slane %v1431, 1
        %v1709 = vrot.slane %v1431, 2
        %v1710 = vrot.slane %v1431, 3
        %v1711 = vrot.slane %v1431, 4
        %v1712 = vrot.slane %v1431, 5
        %v1713 = vrot.slane %v1431, 6
        %v1714 = vrot.slane %v1431, 7
        %v1715 = vperm.slane %v1431, 0
        %v1716 = vperm.slane %v1708, 0
        %v1717 = vperm.slane %v1709, 0
        %v1718 = vperm.slane %v1710, 0
        %v1719 = vperm.slane %v1711, 0
        %v1720 = vperm.slane %v1712, 0
        %v1721 = vperm.slane %v1713, 0
        %v1722 = vperm.slane %v1714, 0
        %v1731 = vmul.f32 %v1675, %v1715
        %v1732 = vmul.f32 %v1676, %v1715
        %v1733 = vmul.f32 %v1677, %v1715
        %v1734 = vmul.f32 %v1678, %v1715
        %v1735 = vmul.f32 %v1679, %v1716
        %v1736 = vmul.f32 %v1680, %v1716
        %v1737 = vmul.f32 %v1681, %v1716
        %v1738 = vmul.f32 %v1682, %v1716
        %v1739 = vmul.f32 %v1683, %v1717
        %v1740 = vmul.f32 %v1684, %v1717
        %v1741 = vmul.f32 %v1685, %v1717
        %v1742 = vmul.f32 %v1686, %v1717
        %v1743 = vmul.f32 %v1687, %v1718
        %v1744 = vmul.f32 %v1688, %v1718
        %v1745 = vmul.f32 %v1689, %v1718
        %v1746 = vmul.f32 %v1690, %v1718
        %v1747 = vmul.f32 %v1691, %v1719
        %v1748 = vmul.f32 %v1692, %v1719
        %v1749 = vmul.f32 %v1693, %v1719
        %v1750 = vmul.f32 %v1694, %v1719
        %v1751 = vmul.f32 %v1695, %v1720
        %v1752 = vmul.f32 %v1696, %v1720
        %v1753 = vmul.f32 %v1697, %v1720
        %v1754 = vmul.f32 %v1698, %v1720
        %v1755 = vmul.f32 %v1699, %v1721
        %v1756 = vmul.f32 %v1700, %v1721
        %v1757 = vmul.f32 %v1701, %v1721
        %v1758 = vmul.f32 %v1702, %v1721
        %v1759 = vmul.f32 %v1703, %v1722
        %v1760 = vmul.f32 %v1704, %v1722
        %v1761 = vmul.f32 %v1705, %v1722
        %v1762 = vmul.f32 %v1706, %v1722
        %v1763 = vsel %vm1277, %v1731, 0.0
        %1764 = vadd.xlane.f32.xlu0 %v1763
        %v1765 = vpop.xlane.xlu0 %1764
        %v1766 = vsel %vm1277, %v1732, 0.0
        %1767 = vadd.xlane.f32.xlu0 %v1766
        %v1768 = vpop.xlane.xlu0 %1767
        %v1769 = vsel %vm1277, %v1733, 0.0
        %1770 = vadd.xlane.f32.xlu0 %v1769
        %v1771 = vpop.xlane.xlu0 %1770
        %v1772 = vsel %vm1277, %v1734, 0.0
        %1773 = vadd.xlane.f32.xlu0 %v1772
        %v1774 = vpop.xlane.xlu0 %1773
        %v1775 = vsel %vm1277, %v1735, 0.0
        %1776 = vadd.xlane.f32.xlu0 %v1775
        %v1777 = vpop.xlane.xlu0 %1776
        %v1778 = vsel %vm1277, %v1736, 0.0
        %1779 = vadd.xlane.f32.xlu0 %v1778
        %v1780 = vpop.xlane.xlu0 %1779
        %v1781 = vsel %vm1277, %v1737, 0.0
        %1782 = vadd.xlane.f32.xlu0 %v1781
        %v1783 = vpop.xlane.xlu0 %1782
        %v1784 = vsel %vm1277, %v1738, 0.0
        %1785 = vadd.xlane.f32.xlu0 %v1784
        %v1786 = vpop.xlane.xlu0 %1785
        %v1787 = vsel %vm1277, %v1739, 0.0
        %1788 = vadd.xlane.f32.xlu0 %v1787
        %v1789 = vpop.xlane.xlu0 %1788
        %v1790 = vsel %vm1277, %v1740, 0.0
        %1791 = vadd.xlane.f32.xlu0 %v1790
        %v1792 = vpop.xlane.xlu0 %1791
        %v1793 = vsel %vm1277, %v1741, 0.0
        %1794 = vadd.xlane.f32.xlu0 %v1793
        %v1795 = vpop.xlane.xlu0 %1794
        %v1796 = vsel %vm1277, %v1742, 0.0
        %1797 = vadd.xlane.f32.xlu0 %v1796
        %v1798 = vpop.xlane.xlu0 %1797
        %v1799 = vsel %vm1277, %v1743, 0.0
        %1800 = vadd.xlane.f32.xlu0 %v1799
        %v1801 = vpop.xlane.xlu0 %1800
        %v1802 = vsel %vm1277, %v1744, 0.0
        %1803 = vadd.xlane.f32.xlu0 %v1802
        %v1804 = vpop.xlane.xlu0 %1803
        %v1805 = vsel %vm1277, %v1745, 0.0
        %1806 = vadd.xlane.f32.xlu0 %v1805
        %v1807 = vpop.xlane.xlu0 %1806
        %v1808 = vsel %vm1277, %v1746, 0.0
        %1809 = vadd.xlane.f32.xlu0 %v1808
        %v1810 = vpop.xlane.xlu0 %1809
        %v1811 = vsel %vm1277, %v1747, 0.0
        %1812 = vadd.xlane.f32.xlu0 %v1811
        %v1813 = vpop.xlane.xlu0 %1812
        %v1814 = vsel %vm1277, %v1748, 0.0
        %1815 = vadd.xlane.f32.xlu0 %v1814
        %v1816 = vpop.xlane.xlu0 %1815
        %v1817 = vsel %vm1277, %v1749, 0.0
        %1818 = vadd.xlane.f32.xlu0 %v1817
        %v1819 = vpop.xlane.xlu0 %1818
        %v1820 = vsel %vm1277, %v1750, 0.0
        %1821 = vadd.xlane.f32.xlu0 %v1820
        %v1822 = vpop.xlane.xlu0 %1821
        %v1823 = vsel %vm1277, %v1751, 0.0
        %1824 = vadd.xlane.f32.xlu0 %v1823
        %v1825 = vpop.xlane.xlu0 %1824
        %v1826 = vsel %vm1277, %v1752, 0.0
        %1827 = vadd.xlane.f32.xlu0 %v1826
        %v1828 = vpop.xlane.xlu0 %1827
        %v1829 = vsel %vm1277, %v1753, 0.0
        %1830 = vadd.xlane.f32.xlu0 %v1829
        %v1831 = vpop.xlane.xlu0 %1830
        %v1832 = vsel %vm1277, %v1754, 0.0
        %1833 = vadd.xlane.f32.xlu0 %v1832
        %v1834 = vpop.xlane.xlu0 %1833
        %v1835 = vsel %vm1277, %v1755, 0.0
        %1836 = vadd.xlane.f32.xlu0 %v1835
        %v1837 = vpop.xlane.xlu0 %1836
        %v1838 = vsel %vm1277, %v1756, 0.0
        %1839 = vadd.xlane.f32.xlu0 %v1838
        %v1840 = vpop.xlane.xlu0 %1839
        %v1841 = vsel %vm1277, %v1757, 0.0
        %1842 = vadd.xlane.f32.xlu0 %v1841
        %v1843 = vpop.xlane.xlu0 %1842
        %v1844 = vsel %vm1277, %v1758, 0.0
        %1845 = vadd.xlane.f32.xlu0 %v1844
        %v1846 = vpop.xlane.xlu0 %1845
        %v1847 = vsel %vm1277, %v1759, 0.0
        %1848 = vadd.xlane.f32.xlu0 %v1847
        %v1849 = vpop.xlane.xlu0 %1848
        %v1850 = vsel %vm1277, %v1760, 0.0
        %1851 = vadd.xlane.f32.xlu0 %v1850
        %v1852 = vpop.xlane.xlu0 %1851
        %v1853 = vsel %vm1277, %v1761, 0.0
        %1854 = vadd.xlane.f32.xlu0 %v1853
        %v1855 = vpop.xlane.xlu0 %1854
        %v1856 = vsel %vm1277, %v1762, 0.0
        %1857 = vadd.xlane.f32.xlu0 %v1856
        %v1858 = vpop.xlane.xlu0 %1857
        %v1860 = vperm.slane %v1450, 0
        %v1861 = vperm.slane %v1450, 1
        %v1862 = vperm.slane %v1450, 2
        %v1863 = vperm.slane %v1450, 3
        %v1864 = vperm.slane %v1450, 4
        %v1865 = vperm.slane %v1450, 5
        %v1866 = vperm.slane %v1450, 6
        %v1867 = vperm.slane %v1450, 7
        %v1876 = vmul.f32 %v1765, %v1860
        %v1877 = vmul.f32 %v1768, %v1860
        %v1878 = vmul.f32 %v1771, %v1860
        %v1879 = vmul.f32 %v1774, %v1860
        %v1880 = vmul.f32 %v1777, %v1861
        %v1881 = vmul.f32 %v1780, %v1861
        %v1882 = vmul.f32 %v1783, %v1861
        %v1883 = vmul.f32 %v1786, %v1861
        %v1884 = vmul.f32 %v1789, %v1862
        %v1885 = vmul.f32 %v1792, %v1862
        %v1886 = vmul.f32 %v1795, %v1862
        %v1887 = vmul.f32 %v1798, %v1862
        %v1888 = vmul.f32 %v1801, %v1863
        %v1889 = vmul.f32 %v1804, %v1863
        %v1890 = vmul.f32 %v1807, %v1863
        %v1891 = vmul.f32 %v1810, %v1863
        %v1892 = vmul.f32 %v1813, %v1864
        %v1893 = vmul.f32 %v1816, %v1864
        %v1894 = vmul.f32 %v1819, %v1864
        %v1895 = vmul.f32 %v1822, %v1864
        %v1896 = vmul.f32 %v1825, %v1865
        %v1897 = vmul.f32 %v1828, %v1865
        %v1898 = vmul.f32 %v1831, %v1865
        %v1899 = vmul.f32 %v1834, %v1865
        %v1900 = vmul.f32 %v1837, %v1866
        %v1901 = vmul.f32 %v1840, %v1866
        %v1902 = vmul.f32 %v1843, %v1866
        %v1903 = vmul.f32 %v1846, %v1866
        %v1904 = vmul.f32 %v1849, %v1867
        %v1905 = vmul.f32 %v1852, %v1867
        %v1906 = vmul.f32 %v1855, %v1867
        %v1907 = vmul.f32 %v1858, %v1867
        %v1908 = vsel %vm1435, 1.0, 0.0
        %v1909 = vld [vmem:[%s6] sm:$0xff]
        %v1910 = vld [vmem:[%s6 + $0x8] sm:$0xff]
        %v1911 = vld [vmem:[%s6 + $0x10] sm:$0xff]
        %v1912 = vld [vmem:[%s6 + $0x18] sm:$0xff]
        %v1914 = vmul.f32 %v1908, %v1383
        %1947 = vset.pattern.permute.xlu0 0
        %1948 = vperm.xlu0 %1947, %v1876
        %v1949 = vpop.permute.xlu0 %1948
        %1950 = vset.pattern.permute.xlu0 0
        %1951 = vperm.xlu0 %1950, %v1877
        %v1952 = vpop.permute.xlu0 %1951
        %1953 = vset.pattern.permute.xlu0 0
        %1954 = vperm.xlu0 %1953, %v1878
        %v1955 = vpop.permute.xlu0 %1954
        %1956 = vset.pattern.permute.xlu0 0
        %1957 = vperm.xlu0 %1956, %v1879
        %v1958 = vpop.permute.xlu0 %1957
        %1959 = vset.pattern.permute.xlu0 0
        %1960 = vperm.xlu0 %1959, %v1880
        %v1961 = vpop.permute.xlu0 %1960
        %1962 = vset.pattern.permute.xlu0 0
        %1963 = vperm.xlu0 %1962, %v1881
        %v1964 = vpop.permute.xlu0 %1963
        %1965 = vset.pattern.permute.xlu0 0
        %1966 = vperm.xlu0 %1965, %v1882
        %v1967 = vpop.permute.xlu0 %1966
        %1968 = vset.pattern.permute.xlu0 0
        %1969 = vperm.xlu0 %1968, %v1883
        %v1970 = vpop.permute.xlu0 %1969
        %1971 = vset.pattern.permute.xlu0 0
        %1972 = vperm.xlu0 %1971, %v1884
        %v1973 = vpop.permute.xlu0 %1972
        %1974 = vset.pattern.permute.xlu0 0
        %1975 = vperm.xlu0 %1974, %v1885
        %v1976 = vpop.permute.xlu0 %1975
        %1977 = vset.pattern.permute.xlu0 0
        %1978 = vperm.xlu0 %1977, %v1886
        %v1979 = vpop.permute.xlu0 %1978
        %1980 = vset.pattern.permute.xlu0 0
        %1981 = vperm.xlu0 %1980, %v1887
        %v1982 = vpop.permute.xlu0 %1981
        %1983 = vset.pattern.permute.xlu0 0
        %1984 = vperm.xlu0 %1983, %v1888
        %v1985 = vpop.permute.xlu0 %1984
        %1986 = vset.pattern.permute.xlu0 0
        %1987 = vperm.xlu0 %1986, %v1889
        %v1988 = vpop.permute.xlu0 %1987
        %1989 = vset.pattern.permute.xlu0 0
        %1990 = vperm.xlu0 %1989, %v1890
        %v1991 = vpop.permute.xlu0 %1990
        %1992 = vset.pattern.permute.xlu0 0
        %1993 = vperm.xlu0 %1992, %v1891
        %v1994 = vpop.permute.xlu0 %1993
        %1995 = vset.pattern.permute.xlu0 0
        %1996 = vperm.xlu0 %1995, %v1892
        %v1997 = vpop.permute.xlu0 %1996
        %1998 = vset.pattern.permute.xlu0 0
        %1999 = vperm.xlu0 %1998, %v1893
        %v2000 = vpop.permute.xlu0 %1999
        %2001 = vset.pattern.permute.xlu0 0
        %2002 = vperm.xlu0 %2001, %v1894
        %v2003 = vpop.permute.xlu0 %2002
        %2004 = vset.pattern.permute.xlu0 0
        %2005 = vperm.xlu0 %2004, %v1895
        %v2006 = vpop.permute.xlu0 %2005
        %2007 = vset.pattern.permute.xlu0 0
        %2008 = vperm.xlu0 %2007, %v1896
        %v2009 = vpop.permute.xlu0 %2008
        %2010 = vset.pattern.permute.xlu0 0
        %2011 = vperm.xlu0 %2010, %v1897
        %v2012 = vpop.permute.xlu0 %2011
        %2013 = vset.pattern.permute.xlu0 0
        %2014 = vperm.xlu0 %2013, %v1898
        %v2015 = vpop.permute.xlu0 %2014
        %2016 = vset.pattern.permute.xlu0 0
        %2017 = vperm.xlu0 %2016, %v1899
        %v2018 = vpop.permute.xlu0 %2017
        %2019 = vset.pattern.permute.xlu0 0
        %2020 = vperm.xlu0 %2019, %v1900
        %v2021 = vpop.permute.xlu0 %2020
        %2022 = vset.pattern.permute.xlu0 0
        %2023 = vperm.xlu0 %2022, %v1901
        %v2024 = vpop.permute.xlu0 %2023
        %2025 = vset.pattern.permute.xlu0 0
        %2026 = vperm.xlu0 %2025, %v1902
        %v2027 = vpop.permute.xlu0 %2026
        %2028 = vset.pattern.permute.xlu0 0
        %2029 = vperm.xlu0 %2028, %v1903
        %v2030 = vpop.permute.xlu0 %2029
        %2031 = vset.pattern.permute.xlu0 0
        %2032 = vperm.xlu0 %2031, %v1904
        %v2033 = vpop.permute.xlu0 %2032
        %2034 = vset.pattern.permute.xlu0 0
        %2035 = vperm.xlu0 %2034, %v1905
        %v2036 = vpop.permute.xlu0 %2035
        %2037 = vset.pattern.permute.xlu0 0
        %2038 = vperm.xlu0 %2037, %v1906
        %v2039 = vpop.permute.xlu0 %2038
        %2040 = vset.pattern.permute.xlu0 0
        %2041 = vperm.xlu0 %2040, %v1907
        %v2042 = vpop.permute.xlu0 %2041
        %v2043 = vlaneseq
        %v2044 = vand.u32 %v2043, 127
        %v2045 = vperm.slane %v1949, %v2044
        %v2046 = vadd.s32 %v2044, 4294967288
        %v2047 = vperm.slane %v1952, %v2046
        %vm2048 = vcmask 130112
        %v2049 = vsel %vm2048, %v2047, %v2045
        %v2050 = vadd.s32 %v2044, 4294967280
        %v2051 = vperm.slane %v1955, %v2050
        %vm2052 = vcmask 195712
        %v2053 = vsel %vm2052, %v2051, %v2049
        %v2054 = vadd.s32 %v2044, 4294967272
        %v2055 = vperm.slane %v1958, %v2054
        %vm2056 = vcmask 261312
        %v2057 = vsel %vm2056, %v2055, %v2053
        %v2058 = vperm.slane %v1961, %v2044
        %v2059 = vperm.slane %v1964, %v2046
        %v2060 = vsel %vm2048, %v2059, %v2058
        %v2061 = vperm.slane %v1967, %v2050
        %v2062 = vsel %vm2052, %v2061, %v2060
        %v2063 = vperm.slane %v1970, %v2054
        %v2064 = vsel %vm2056, %v2063, %v2062
        %v2065 = vperm.slane %v1973, %v2044
        %v2066 = vperm.slane %v1976, %v2046
        %v2067 = vsel %vm2048, %v2066, %v2065
        %v2068 = vperm.slane %v1979, %v2050
        %v2069 = vsel %vm2052, %v2068, %v2067
        %v2070 = vperm.slane %v1982, %v2054
        %v2071 = vsel %vm2056, %v2070, %v2069
        %v2072 = vperm.slane %v1985, %v2044
        %v2073 = vperm.slane %v1988, %v2046
        %v2074 = vsel %vm2048, %v2073, %v2072
        %v2075 = vperm.slane %v1991, %v2050
        %v2076 = vsel %vm2052, %v2075, %v2074
        %v2077 = vperm.slane %v1994, %v2054
        %v2078 = vsel %vm2056, %v2077, %v2076
        %v2079 = vperm.slane %v1997, %v2044
        %v2080 = vperm.slane %v2000, %v2046
        %v2081 = vsel %vm2048, %v2080, %v2079
        %v2082 = vperm.slane %v2003, %v2050
        %v2083 = vsel %vm2052, %v2082, %v2081
        %v2084 = vperm.slane %v2006, %v2054
        %v2085 = vsel %vm2056, %v2084, %v2083
        %v2086 = vperm.slane %v2009, %v2044
        %v2087 = vperm.slane %v2012, %v2046
        %v2088 = vsel %vm2048, %v2087, %v2086
        %v2089 = vperm.slane %v2015, %v2050
        %v2090 = vsel %vm2052, %v2089, %v2088
        %v2091 = vperm.slane %v2018, %v2054
        %v2092 = vsel %vm2056, %v2091, %v2090
        %v2093 = vperm.slane %v2021, %v2044
        %v2094 = vperm.slane %v2024, %v2046
        %v2095 = vsel %vm2048, %v2094, %v2093
        %v2096 = vperm.slane %v2027, %v2050
        %v2097 = vsel %vm2052, %v2096, %v2095
        %v2098 = vperm.slane %v2030, %v2054
        %v2099 = vsel %vm2056, %v2098, %v2097
        %v2100 = vperm.slane %v2033, %v2044
        %v2101 = vperm.slane %v2036, %v2046
        %v2102 = vsel %vm2048, %v2101, %v2100
        %v2103 = vperm.slane %v2039, %v2050
        %v2104 = vsel %vm2052, %v2103, %v2102
        %v2105 = vperm.slane %v2042, %v2054
        %v2106 = vsel %vm2056, %v2105, %v2104
        %v2107 = vsel %vm1409, %v2064, %v2057
        %v2108 = vsel %vm1411, %v2071, %v2107
        %v2109 = vsel %vm1413, %v2078, %v2108
        %v2110 = vsel %vm1415, %v2085, %v2109
        %v2111 = vsel %vm1417, %v2092, %v2110
        %v2112 = vsel %vm1419, %v2099, %v2111
        %v2113 = vsel %vm1421, %v2106, %v2112
        %vm2114 = vcmask 261120
        %v2115 = vsel %vm2114, %v2113, 0
        %2117 = vmatpush.msra.mxu0 0.0
        %2118 = vmatpush.msra.mxu0 0.0
        %2119 = vmatpush.msra.mxu0 0.0
        %2120 = vmatpush.msra.mxu0 0.0
        %2121 = vmatpush.msra.mxu0 0.0
        %2122 = vmatpush.msra.mxu0 0.0
        %2123 = vmatpush.msra.mxu0 0.0
        %2124 = vmatpush.msra.mxu0 0.0
        %2125 = vmatpush.msra.mxu0 0.0
        %2126 = vmatpush.msra.mxu0 0.0
        %2127 = vmatpush.msra.mxu0 0.0
        %2128 = vmatpush.msra.mxu0 0.0
        %v2129 = vand.u32 %v1912, 4294901760
        %2130 = vmatpush.msra.mxu0 %v2129
        %v2131 = vand.u32 %v1911, 4294901760
        %2132 = vmatpush.msra.mxu0 %v2131
        %v2133 = vand.u32 %v1910, 4294901760
        %2134 = vmatpush.msra.mxu0 %v2133
        %v2135 = vand.u32 %v1909, 4294901760
        %2136 = vmatpush.msra.mxu0 %v2135
        %v2137 = vand.u32 %v2115, 4294901760
        %v2138 = vsub.f32 %v2115, %v2137
        %v2139 = vand.u32 %v2138, 4294901760
        %v2140 = vsub.f32 %v2138, %v2139
        %v2141 = vand.u32 %v2140, 4294901760
        %2142 = vmatmul.f32.gmra.mxu0 %v2141
        %v2143 = vpop.f32.mrf.mxu0
        %v2144 = vadd.f32 %v1914, %v2143
        %2145 = vdwg.mxu0
        %2146 = vmatpush.msra.mxu0 0.0
        %2147 = vmatpush.msra.mxu0 0.0
        %2148 = vmatpush.msra.mxu0 0.0
        %2149 = vmatpush.msra.mxu0 0.0
        %2150 = vmatpush.msra.mxu0 0.0
        %2151 = vmatpush.msra.mxu0 0.0
        %2152 = vmatpush.msra.mxu0 0.0
        %2153 = vmatpush.msra.mxu0 0.0
        %2154 = vmatpush.msra.mxu0 0.0
        %2155 = vmatpush.msra.mxu0 0.0
        %2156 = vmatpush.msra.mxu0 0.0
        %2157 = vmatpush.msra.mxu0 0.0
        %v2158 = vand.u32 %v1912, 4294901760
        %v2159 = vsub.f32 %v1912, %v2158
        %v2160 = vand.u32 %v2159, 4294901760
        %v2161 = vsub.f32 %v2159, %v2160
        %v2162 = vand.u32 %v2161, 4294901760
        %2163 = vmatpush.msra.mxu0 %v2162
        %v2164 = vand.u32 %v1911, 4294901760
        %v2165 = vsub.f32 %v1911, %v2164
        %v2166 = vand.u32 %v2165, 4294901760
        %v2167 = vsub.f32 %v2165, %v2166
        %v2168 = vand.u32 %v2167, 4294901760
        %2169 = vmatpush.msra.mxu0 %v2168
        %v2170 = vand.u32 %v1910, 4294901760
        %v2171 = vsub.f32 %v1910, %v2170
        %v2172 = vand.u32 %v2171, 4294901760
        %v2173 = vsub.f32 %v2171, %v2172
        %v2174 = vand.u32 %v2173, 4294901760
        %2175 = vmatpush.msra.mxu0 %v2174
        %v2176 = vand.u32 %v1909, 4294901760
        %v2177 = vsub.f32 %v1909, %v2176
        %v2178 = vand.u32 %v2177, 4294901760
        %v2179 = vsub.f32 %v2177, %v2178
        %v2180 = vand.u32 %v2179, 4294901760
        %2181 = vmatpush.msra.mxu0 %v2180
        %v2182 = vand.u32 %v2115, 4294901760
        %2183 = vmatmul.f32.gmra.mxu0 %v2182
        %v2184 = vpop.f32.mrf.mxu0
        %v2185 = vadd.f32 %v2144, %v2184
        %2186 = vdwg.mxu0
        %2187 = vmatpush.msra.mxu0 0.0
        %2188 = vmatpush.msra.mxu0 0.0
        %2189 = vmatpush.msra.mxu0 0.0
        %2190 = vmatpush.msra.mxu0 0.0
        %2191 = vmatpush.msra.mxu0 0.0
        %2192 = vmatpush.msra.mxu0 0.0
        %2193 = vmatpush.msra.mxu0 0.0
        %2194 = vmatpush.msra.mxu0 0.0
        %2195 = vmatpush.msra.mxu0 0.0
        %2196 = vmatpush.msra.mxu0 0.0
        %2197 = vmatpush.msra.mxu0 0.0
        %2198 = vmatpush.msra.mxu0 0.0
        %v2199 = vand.u32 %v1912, 4294901760
        %v2200 = vsub.f32 %v1912, %v2199
        %2201 = vmatpush.msra.mxu0 %v2200
        %v2202 = vand.u32 %v1911, 4294901760
        %v2203 = vsub.f32 %v1911, %v2202
        %2204 = vmatpush.msra.mxu0 %v2203
        %v2205 = vand.u32 %v1910, 4294901760
        %v2206 = vsub.f32 %v1910, %v2205
        %2207 = vmatpush.msra.mxu0 %v2206
        %v2208 = vand.u32 %v1909, 4294901760
        %v2209 = vsub.f32 %v1909, %v2208
        %2210 = vmatpush.msra.mxu0 %v2209
        %v2211 = vand.u32 %v2115, 4294901760
        %v2212 = vsub.f32 %v2115, %v2211
        %2213 = vmatmul.f32.gmra.mxu0 %v2212
        %v2214 = vpop.f32.mrf.mxu0
        %v2215 = vadd.f32 %v2185, %v2214
        %2216 = vdwg.mxu0
        %2217 = vmatpush.msra.mxu0 0.0
        %2218 = vmatpush.msra.mxu0 0.0
        %2219 = vmatpush.msra.mxu0 0.0
        %2220 = vmatpush.msra.mxu0 0.0
        %2221 = vmatpush.msra.mxu0 0.0
        %2222 = vmatpush.msra.mxu0 0.0
        %2223 = vmatpush.msra.mxu0 0.0
        %2224 = vmatpush.msra.mxu0 0.0
        %2225 = vmatpush.msra.mxu0 0.0
        %2226 = vmatpush.msra.mxu0 0.0
        %2227 = vmatpush.msra.mxu0 0.0
        %2228 = vmatpush.msra.mxu0 0.0
        %v2229 = vand.u32 %v1912, 4294901760
        %2230 = vmatpush.msra.mxu0 %v2229
        %v2231 = vand.u32 %v1911, 4294901760
        %2232 = vmatpush.msra.mxu0 %v2231
        %v2233 = vand.u32 %v1910, 4294901760
        %2234 = vmatpush.msra.mxu0 %v2233
        %v2235 = vand.u32 %v1909, 4294901760
        %2236 = vmatpush.msra.mxu0 %v2235
        %v2237 = vand.u32 %v2115, 4294901760
        %v2238 = vsub.f32 %v2115, %v2237
        %v2239 = vand.u32 %v2238, 4294901760
        %2240 = vmatmul.f32.gmra.mxu0 %v2239
        %v2241 = vpop.f32.mrf.mxu0
        %v2242 = vadd.f32 %v2215, %v2241
        %2243 = vdwg.mxu0
        %2244 = vmatpush.msra.mxu0 0.0
        %2245 = vmatpush.msra.mxu0 0.0
        %2246 = vmatpush.msra.mxu0 0.0
        %2247 = vmatpush.msra.mxu0 0.0
        %2248 = vmatpush.msra.mxu0 0.0
        %2249 = vmatpush.msra.mxu0 0.0
        %2250 = vmatpush.msra.mxu0 0.0
        %2251 = vmatpush.msra.mxu0 0.0
        %2252 = vmatpush.msra.mxu0 0.0
        %2253 = vmatpush.msra.mxu0 0.0
        %2254 = vmatpush.msra.mxu0 0.0
        %2255 = vmatpush.msra.mxu0 0.0
        %v2256 = vand.u32 %v1912, 4294901760
        %v2257 = vsub.f32 %v1912, %v2256
        %v2258 = vand.u32 %v2257, 4294901760
        %2259 = vmatpush.msra.mxu0 %v2258
        %v2260 = vand.u32 %v1911, 4294901760
        %v2261 = vsub.f32 %v1911, %v2260
        %v2262 = vand.u32 %v2261, 4294901760
        %2263 = vmatpush.msra.mxu0 %v2262
        %v2264 = vand.u32 %v1910, 4294901760
        %v2265 = vsub.f32 %v1910, %v2264
        %v2266 = vand.u32 %v2265, 4294901760
        %2267 = vmatpush.msra.mxu0 %v2266
        %v2268 = vand.u32 %v1909, 4294901760
        %v2269 = vsub.f32 %v1909, %v2268
        %v2270 = vand.u32 %v2269, 4294901760
        %2271 = vmatpush.msra.mxu0 %v2270
        %v2272 = vand.u32 %v2115, 4294901760
        %2273 = vmatmul.f32.gmra.mxu0 %v2272
        %v2274 = vpop.f32.mrf.mxu0
        %v2275 = vadd.f32 %v2242, %v2274
        %2276 = vdwg.mxu0
        %2277 = vmatpush.msra.mxu0 0.0
        %2278 = vmatpush.msra.mxu0 0.0
        %2279 = vmatpush.msra.mxu0 0.0
        %2280 = vmatpush.msra.mxu0 0.0
        %2281 = vmatpush.msra.mxu0 0.0
        %2282 = vmatpush.msra.mxu0 0.0
        %2283 = vmatpush.msra.mxu0 0.0
        %2284 = vmatpush.msra.mxu0 0.0
        %2285 = vmatpush.msra.mxu0 0.0
        %2286 = vmatpush.msra.mxu0 0.0
        %2287 = vmatpush.msra.mxu0 0.0
        %2288 = vmatpush.msra.mxu0 0.0
        %v2289 = vand.u32 %v1912, 4294901760
        %2290 = vmatpush.msra.mxu0 %v2289
        %v2291 = vand.u32 %v1911, 4294901760
        %2292 = vmatpush.msra.mxu0 %v2291
        %v2293 = vand.u32 %v1910, 4294901760
        %2294 = vmatpush.msra.mxu0 %v2293
        %v2295 = vand.u32 %v1909, 4294901760
        %2296 = vmatpush.msra.mxu0 %v2295
        %v2297 = vand.u32 %v2115, 4294901760
        %2298 = vmatmul.f32.gmra.mxu0 %v2297
        %v2299 = vpop.f32.mrf.mxu0
        %v2300 = vadd.f32 %v2275, %v2299
        %2301 = vdwg.mxu0
        %v2302 = vld [vmem:[%s7] sm:$0xff]
        %v2303 = vld [vmem:[%s7 + $0x8] sm:$0xff]
        %v2304 = vld [vmem:[%s7 + $0x10] sm:$0xff]
        %v2305 = vld [vmem:[%s7 + $0x18] sm:$0xff]
        %v2307 = vsel %vm2114, %v2300, 0
        %2309 = vmatpush.msra.mxu0 0.0
        %2310 = vmatpush.msra.mxu0 0.0
        %2311 = vmatpush.msra.mxu0 0.0
        %2312 = vmatpush.msra.mxu0 0.0
        %2313 = vmatpush.msra.mxu0 0.0
        %2314 = vmatpush.msra.mxu0 0.0
        %2315 = vmatpush.msra.mxu0 0.0
        %2316 = vmatpush.msra.mxu0 0.0
        %2317 = vmatpush.msra.mxu0 0.0
        %2318 = vmatpush.msra.mxu0 0.0
        %2319 = vmatpush.msra.mxu0 0.0
        %2320 = vmatpush.msra.mxu0 0.0
        %v2321 = vand.u32 %v2305, 4294901760
        %2322 = vmatpush.msra.mxu0 %v2321
        %v2323 = vand.u32 %v2304, 4294901760
        %2324 = vmatpush.msra.mxu0 %v2323
        %v2325 = vand.u32 %v2303, 4294901760
        %2326 = vmatpush.msra.mxu0 %v2325
        %v2327 = vand.u32 %v2302, 4294901760
        %2328 = vmatpush.msra.mxu0 %v2327
        %v2329 = vand.u32 %v2307, 4294901760
        %v2330 = vsub.f32 %v2307, %v2329
        %v2331 = vand.u32 %v2330, 4294901760
        %v2332 = vsub.f32 %v2330, %v2331
        %v2333 = vand.u32 %v2332, 4294901760
        %2334 = vmatmul.f32.gmra.mxu0 %v2333
        %v2335 = vpop.f32.mrf.mxu0
        %v2336 = vadd.f32 0.0, %v2335
        %2337 = vdwg.mxu0
        %2338 = vmatpush.msra.mxu0 0.0
        %2339 = vmatpush.msra.mxu0 0.0
        %2340 = vmatpush.msra.mxu0 0.0
        %2341 = vmatpush.msra.mxu0 0.0
        %2342 = vmatpush.msra.mxu0 0.0
        %2343 = vmatpush.msra.mxu0 0.0
        %2344 = vmatpush.msra.mxu0 0.0
        %2345 = vmatpush.msra.mxu0 0.0
        %2346 = vmatpush.msra.mxu0 0.0
        %2347 = vmatpush.msra.mxu0 0.0
        %2348 = vmatpush.msra.mxu0 0.0
        %2349 = vmatpush.msra.mxu0 0.0
        %v2350 = vand.u32 %v2305, 4294901760
        %v2351 = vsub.f32 %v2305, %v2350
        %v2352 = vand.u32 %v2351, 4294901760
        %v2353 = vsub.f32 %v2351, %v2352
        %v2354 = vand.u32 %v2353, 4294901760
        %2355 = vmatpush.msra.mxu0 %v2354
        %v2356 = vand.u32 %v2304, 4294901760
        %v2357 = vsub.f32 %v2304, %v2356
        %v2358 = vand.u32 %v2357, 4294901760
        %v2359 = vsub.f32 %v2357, %v2358
        %v2360 = vand.u32 %v2359, 4294901760
        %2361 = vmatpush.msra.mxu0 %v2360
        %v2362 = vand.u32 %v2303, 4294901760
        %v2363 = vsub.f32 %v2303, %v2362
        %v2364 = vand.u32 %v2363, 4294901760
        %v2365 = vsub.f32 %v2363, %v2364
        %v2366 = vand.u32 %v2365, 4294901760
        %2367 = vmatpush.msra.mxu0 %v2366
        %v2368 = vand.u32 %v2302, 4294901760
        %v2369 = vsub.f32 %v2302, %v2368
        %v2370 = vand.u32 %v2369, 4294901760
        %v2371 = vsub.f32 %v2369, %v2370
        %v2372 = vand.u32 %v2371, 4294901760
        %2373 = vmatpush.msra.mxu0 %v2372
        %v2374 = vand.u32 %v2307, 4294901760
        %2375 = vmatmul.f32.gmra.mxu0 %v2374
        %v2376 = vpop.f32.mrf.mxu0
        %v2377 = vadd.f32 %v2336, %v2376
        %2378 = vdwg.mxu0
        %2379 = vmatpush.msra.mxu0 0.0
        %2380 = vmatpush.msra.mxu0 0.0
        %2381 = vmatpush.msra.mxu0 0.0
        %2382 = vmatpush.msra.mxu0 0.0
        %2383 = vmatpush.msra.mxu0 0.0
        %2384 = vmatpush.msra.mxu0 0.0
        %2385 = vmatpush.msra.mxu0 0.0
        %2386 = vmatpush.msra.mxu0 0.0
        %2387 = vmatpush.msra.mxu0 0.0
        %2388 = vmatpush.msra.mxu0 0.0
        %2389 = vmatpush.msra.mxu0 0.0
        %2390 = vmatpush.msra.mxu0 0.0
        %v2391 = vand.u32 %v2305, 4294901760
        %v2392 = vsub.f32 %v2305, %v2391
        %2393 = vmatpush.msra.mxu0 %v2392
        %v2394 = vand.u32 %v2304, 4294901760
        %v2395 = vsub.f32 %v2304, %v2394
        %2396 = vmatpush.msra.mxu0 %v2395
        %v2397 = vand.u32 %v2303, 4294901760
        %v2398 = vsub.f32 %v2303, %v2397
        %2399 = vmatpush.msra.mxu0 %v2398
        %v2400 = vand.u32 %v2302, 4294901760
        %v2401 = vsub.f32 %v2302, %v2400
        %2402 = vmatpush.msra.mxu0 %v2401
        %v2403 = vand.u32 %v2307, 4294901760
        %v2404 = vsub.f32 %v2307, %v2403
        %2405 = vmatmul.f32.gmra.mxu0 %v2404
        %v2406 = vpop.f32.mrf.mxu0
        %v2407 = vadd.f32 %v2377, %v2406
        %2408 = vdwg.mxu0
        %2409 = vmatpush.msra.mxu0 0.0
        %2410 = vmatpush.msra.mxu0 0.0
        %2411 = vmatpush.msra.mxu0 0.0
        %2412 = vmatpush.msra.mxu0 0.0
        %2413 = vmatpush.msra.mxu0 0.0
        %2414 = vmatpush.msra.mxu0 0.0
        %2415 = vmatpush.msra.mxu0 0.0
        %2416 = vmatpush.msra.mxu0 0.0
        %2417 = vmatpush.msra.mxu0 0.0
        %2418 = vmatpush.msra.mxu0 0.0
        %2419 = vmatpush.msra.mxu0 0.0
        %2420 = vmatpush.msra.mxu0 0.0
        %v2421 = vand.u32 %v2305, 4294901760
        %2422 = vmatpush.msra.mxu0 %v2421
        %v2423 = vand.u32 %v2304, 4294901760
        %2424 = vmatpush.msra.mxu0 %v2423
        %v2425 = vand.u32 %v2303, 4294901760
        %2426 = vmatpush.msra.mxu0 %v2425
        %v2427 = vand.u32 %v2302, 4294901760
        %2428 = vmatpush.msra.mxu0 %v2427
        %v2429 = vand.u32 %v2307, 4294901760
        %v2430 = vsub.f32 %v2307, %v2429
        %v2431 = vand.u32 %v2430, 4294901760
        %2432 = vmatmul.f32.gmra.mxu0 %v2431
        %v2433 = vpop.f32.mrf.mxu0
        %v2434 = vadd.f32 %v2407, %v2433
        %2435 = vdwg.mxu0
        %2436 = vmatpush.msra.mxu0 0.0
        %2437 = vmatpush.msra.mxu0 0.0
        %2438 = vmatpush.msra.mxu0 0.0
        %2439 = vmatpush.msra.mxu0 0.0
        %2440 = vmatpush.msra.mxu0 0.0
        %2441 = vmatpush.msra.mxu0 0.0
        %2442 = vmatpush.msra.mxu0 0.0
        %2443 = vmatpush.msra.mxu0 0.0
        %2444 = vmatpush.msra.mxu0 0.0
        %2445 = vmatpush.msra.mxu0 0.0
        %2446 = vmatpush.msra.mxu0 0.0
        %2447 = vmatpush.msra.mxu0 0.0
        %v2448 = vand.u32 %v2305, 4294901760
        %v2449 = vsub.f32 %v2305, %v2448
        %v2450 = vand.u32 %v2449, 4294901760
        %2451 = vmatpush.msra.mxu0 %v2450
        %v2452 = vand.u32 %v2304, 4294901760
        %v2453 = vsub.f32 %v2304, %v2452
        %v2454 = vand.u32 %v2453, 4294901760
        %2455 = vmatpush.msra.mxu0 %v2454
        %v2456 = vand.u32 %v2303, 4294901760
        %v2457 = vsub.f32 %v2303, %v2456
        %v2458 = vand.u32 %v2457, 4294901760
        %2459 = vmatpush.msra.mxu0 %v2458
        %v2460 = vand.u32 %v2302, 4294901760
        %v2461 = vsub.f32 %v2302, %v2460
        %v2462 = vand.u32 %v2461, 4294901760
        %2463 = vmatpush.msra.mxu0 %v2462
        %v2464 = vand.u32 %v2307, 4294901760
        %2465 = vmatmul.f32.gmra.mxu0 %v2464
        %v2466 = vpop.f32.mrf.mxu0
        %v2467 = vadd.f32 %v2434, %v2466
        %2468 = vdwg.mxu0
        %2469 = vmatpush.msra.mxu0 0.0
        %2470 = vmatpush.msra.mxu0 0.0
        %2471 = vmatpush.msra.mxu0 0.0
        %2472 = vmatpush.msra.mxu0 0.0
        %2473 = vmatpush.msra.mxu0 0.0
        %2474 = vmatpush.msra.mxu0 0.0
        %2475 = vmatpush.msra.mxu0 0.0
        %2476 = vmatpush.msra.mxu0 0.0
        %2477 = vmatpush.msra.mxu0 0.0
        %2478 = vmatpush.msra.mxu0 0.0
        %2479 = vmatpush.msra.mxu0 0.0
        %2480 = vmatpush.msra.mxu0 0.0
        %v2481 = vand.u32 %v2305, 4294901760
        %2482 = vmatpush.msra.mxu0 %v2481
        %v2483 = vand.u32 %v2304, 4294901760
        %2484 = vmatpush.msra.mxu0 %v2483
        %v2485 = vand.u32 %v2303, 4294901760
        %2486 = vmatpush.msra.mxu0 %v2485
        %v2487 = vand.u32 %v2302, 4294901760
        %2488 = vmatpush.msra.mxu0 %v2487
        %v2489 = vand.u32 %v2307, 4294901760
        %2490 = vmatmul.f32.gmra.mxu0 %v2489
        %v2491 = vpop.f32.mrf.mxu0
        %v2492 = vadd.f32 %v2467, %v2491
        %2493 = vdwg.mxu0
        %2495 = vrot.lane.b32.xlu0 %v2492, 64
        %v2496 = vpop.permute.xlu0 %2495
        %v2498 = vadd.f32 %v554, %v2496
        %v2499 = vmax.f32 %v2498, 0.0
        %v2500 = vld [vmem:[%s8] sm:$0xff]
        %v2501 = vld [vmem:[%s8 + $0x8] sm:$0xff]
        %v2502 = vld [vmem:[%s8 + $0x10] sm:$0xff]
        %v2503 = vld [vmem:[%s8 + $0x18] sm:$0xff]
        %2505 = vrot.lane.b32.xlu0 %v2499, 64
        %v2506 = vpop.permute.xlu0 %2505
        %2507 = vrot.lane.b32.xlu0 %v1383, 95
        %v2508 = vpop.permute.xlu0 %2507
        %v2510 = vsel %vm2114, %v2506, 0
        %2512 = vmatpush.msra.mxu0 0.0
        %2513 = vmatpush.msra.mxu0 0.0
        %2514 = vmatpush.msra.mxu0 0.0
        %2515 = vmatpush.msra.mxu0 0.0
        %2516 = vmatpush.msra.mxu0 0.0
        %2517 = vmatpush.msra.mxu0 0.0
        %2518 = vmatpush.msra.mxu0 0.0
        %2519 = vmatpush.msra.mxu0 0.0
        %2520 = vmatpush.msra.mxu0 0.0
        %2521 = vmatpush.msra.mxu0 0.0
        %2522 = vmatpush.msra.mxu0 0.0
        %2523 = vmatpush.msra.mxu0 0.0
        %v2524 = vand.u32 %v2503, 4294901760
        %2525 = vmatpush.msra.mxu0 %v2524
        %v2526 = vand.u32 %v2502, 4294901760
        %2527 = vmatpush.msra.mxu0 %v2526
        %v2528 = vand.u32 %v2501, 4294901760
        %2529 = vmatpush.msra.mxu0 %v2528
        %v2530 = vand.u32 %v2500, 4294901760
        %2531 = vmatpush.msra.mxu0 %v2530
        %v2532 = vand.u32 %v2510, 4294901760
        %v2533 = vsub.f32 %v2510, %v2532
        %v2534 = vand.u32 %v2533, 4294901760
        %v2535 = vsub.f32 %v2533, %v2534
        %v2536 = vand.u32 %v2535, 4294901760
        %2537 = vmatmul.f32.gmra.mxu0 %v2536
        %v2538 = vpop.f32.mrf.mxu0
        %v2539 = vadd.f32 %v2508, %v2538
        %2540 = vdwg.mxu0
        %2541 = vmatpush.msra.mxu0 0.0
        %2542 = vmatpush.msra.mxu0 0.0
        %2543 = vmatpush.msra.mxu0 0.0
        %2544 = vmatpush.msra.mxu0 0.0
        %2545 = vmatpush.msra.mxu0 0.0
        %2546 = vmatpush.msra.mxu0 0.0
        %2547 = vmatpush.msra.mxu0 0.0
        %2548 = vmatpush.msra.mxu0 0.0
        %2549 = vmatpush.msra.mxu0 0.0
        %2550 = vmatpush.msra.mxu0 0.0
        %2551 = vmatpush.msra.mxu0 0.0
        %2552 = vmatpush.msra.mxu0 0.0
        %v2553 = vand.u32 %v2503, 4294901760
        %v2554 = vsub.f32 %v2503, %v2553
        %v2555 = vand.u32 %v2554, 4294901760
        %v2556 = vsub.f32 %v2554, %v2555
        %v2557 = vand.u32 %v2556, 4294901760
        %2558 = vmatpush.msra.mxu0 %v2557
        %v2559 = vand.u32 %v2502, 4294901760
        %v2560 = vsub.f32 %v2502, %v2559
        %v2561 = vand.u32 %v2560, 4294901760
        %v2562 = vsub.f32 %v2560, %v2561
        %v2563 = vand.u32 %v2562, 4294901760
        %2564 = vmatpush.msra.mxu0 %v2563
        %v2565 = vand.u32 %v2501, 4294901760
        %v2566 = vsub.f32 %v2501, %v2565
        %v2567 = vand.u32 %v2566, 4294901760
        %v2568 = vsub.f32 %v2566, %v2567
        %v2569 = vand.u32 %v2568, 4294901760
        %2570 = vmatpush.msra.mxu0 %v2569
        %v2571 = vand.u32 %v2500, 4294901760
        %v2572 = vsub.f32 %v2500, %v2571
        %v2573 = vand.u32 %v2572, 4294901760
        %v2574 = vsub.f32 %v2572, %v2573
        %v2575 = vand.u32 %v2574, 4294901760
        %2576 = vmatpush.msra.mxu0 %v2575
        %v2577 = vand.u32 %v2510, 4294901760
        %2578 = vmatmul.f32.gmra.mxu0 %v2577
        %v2579 = vpop.f32.mrf.mxu0
        %v2580 = vadd.f32 %v2539, %v2579
        %2581 = vdwg.mxu0
        %2582 = vmatpush.msra.mxu0 0.0
        %2583 = vmatpush.msra.mxu0 0.0
        %2584 = vmatpush.msra.mxu0 0.0
        %2585 = vmatpush.msra.mxu0 0.0
        %2586 = vmatpush.msra.mxu0 0.0
        %2587 = vmatpush.msra.mxu0 0.0
        %2588 = vmatpush.msra.mxu0 0.0
        %2589 = vmatpush.msra.mxu0 0.0
        %2590 = vmatpush.msra.mxu0 0.0
        %2591 = vmatpush.msra.mxu0 0.0
        %2592 = vmatpush.msra.mxu0 0.0
        %2593 = vmatpush.msra.mxu0 0.0
        %v2594 = vand.u32 %v2503, 4294901760
        %v2595 = vsub.f32 %v2503, %v2594
        %2596 = vmatpush.msra.mxu0 %v2595
        %v2597 = vand.u32 %v2502, 4294901760
        %v2598 = vsub.f32 %v2502, %v2597
        %2599 = vmatpush.msra.mxu0 %v2598
        %v2600 = vand.u32 %v2501, 4294901760
        %v2601 = vsub.f32 %v2501, %v2600
        %2602 = vmatpush.msra.mxu0 %v2601
        %v2603 = vand.u32 %v2500, 4294901760
        %v2604 = vsub.f32 %v2500, %v2603
        %2605 = vmatpush.msra.mxu0 %v2604
        %v2606 = vand.u32 %v2510, 4294901760
        %v2607 = vsub.f32 %v2510, %v2606
        %2608 = vmatmul.f32.gmra.mxu0 %v2607
        %v2609 = vpop.f32.mrf.mxu0
        %v2610 = vadd.f32 %v2580, %v2609
        %2611 = vdwg.mxu0
        %2612 = vmatpush.msra.mxu0 0.0
        %2613 = vmatpush.msra.mxu0 0.0
        %2614 = vmatpush.msra.mxu0 0.0
        %2615 = vmatpush.msra.mxu0 0.0
        %2616 = vmatpush.msra.mxu0 0.0
        %2617 = vmatpush.msra.mxu0 0.0
        %2618 = vmatpush.msra.mxu0 0.0
        %2619 = vmatpush.msra.mxu0 0.0
        %2620 = vmatpush.msra.mxu0 0.0
        %2621 = vmatpush.msra.mxu0 0.0
        %2622 = vmatpush.msra.mxu0 0.0
        %2623 = vmatpush.msra.mxu0 0.0
        %v2624 = vand.u32 %v2503, 4294901760
        %2625 = vmatpush.msra.mxu0 %v2624
        %v2626 = vand.u32 %v2502, 4294901760
        %2627 = vmatpush.msra.mxu0 %v2626
        %v2628 = vand.u32 %v2501, 4294901760
        %2629 = vmatpush.msra.mxu0 %v2628
        %v2630 = vand.u32 %v2500, 4294901760
        %2631 = vmatpush.msra.mxu0 %v2630
        %v2632 = vand.u32 %v2510, 4294901760
        %v2633 = vsub.f32 %v2510, %v2632
        %v2634 = vand.u32 %v2633, 4294901760
        %2635 = vmatmul.f32.gmra.mxu0 %v2634
        %v2636 = vpop.f32.mrf.mxu0
        %v2637 = vadd.f32 %v2610, %v2636
        %2638 = vdwg.mxu0
        %2639 = vmatpush.msra.mxu0 0.0
        %2640 = vmatpush.msra.mxu0 0.0
        %2641 = vmatpush.msra.mxu0 0.0
        %2642 = vmatpush.msra.mxu0 0.0
        %2643 = vmatpush.msra.mxu0 0.0
        %2644 = vmatpush.msra.mxu0 0.0
        %2645 = vmatpush.msra.mxu0 0.0
        %2646 = vmatpush.msra.mxu0 0.0
        %2647 = vmatpush.msra.mxu0 0.0
        %2648 = vmatpush.msra.mxu0 0.0
        %2649 = vmatpush.msra.mxu0 0.0
        %2650 = vmatpush.msra.mxu0 0.0
        %v2651 = vand.u32 %v2503, 4294901760
        %v2652 = vsub.f32 %v2503, %v2651
        %v2653 = vand.u32 %v2652, 4294901760
        %2654 = vmatpush.msra.mxu0 %v2653
        %v2655 = vand.u32 %v2502, 4294901760
        %v2656 = vsub.f32 %v2502, %v2655
        %v2657 = vand.u32 %v2656, 4294901760
        %2658 = vmatpush.msra.mxu0 %v2657
        %v2659 = vand.u32 %v2501, 4294901760
        %v2660 = vsub.f32 %v2501, %v2659
        %v2661 = vand.u32 %v2660, 4294901760
        %2662 = vmatpush.msra.mxu0 %v2661
        %v2663 = vand.u32 %v2500, 4294901760
        %v2664 = vsub.f32 %v2500, %v2663
        %v2665 = vand.u32 %v2664, 4294901760
        %2666 = vmatpush.msra.mxu0 %v2665
        %v2667 = vand.u32 %v2510, 4294901760
        %2668 = vmatmul.f32.gmra.mxu0 %v2667
        %v2669 = vpop.f32.mrf.mxu0
        %v2670 = vadd.f32 %v2637, %v2669
        %2671 = vdwg.mxu0
        %2672 = vmatpush.msra.mxu0 0.0
        %2673 = vmatpush.msra.mxu0 0.0
        %2674 = vmatpush.msra.mxu0 0.0
        %2675 = vmatpush.msra.mxu0 0.0
        %2676 = vmatpush.msra.mxu0 0.0
        %2677 = vmatpush.msra.mxu0 0.0
        %2678 = vmatpush.msra.mxu0 0.0
        %2679 = vmatpush.msra.mxu0 0.0
        %2680 = vmatpush.msra.mxu0 0.0
        %2681 = vmatpush.msra.mxu0 0.0
        %2682 = vmatpush.msra.mxu0 0.0
        %2683 = vmatpush.msra.mxu0 0.0
        %v2684 = vand.u32 %v2503, 4294901760
        %2685 = vmatpush.msra.mxu0 %v2684
        %v2686 = vand.u32 %v2502, 4294901760
        %2687 = vmatpush.msra.mxu0 %v2686
        %v2688 = vand.u32 %v2501, 4294901760
        %2689 = vmatpush.msra.mxu0 %v2688
        %v2690 = vand.u32 %v2500, 4294901760
        %2691 = vmatpush.msra.mxu0 %v2690
        %v2692 = vand.u32 %v2510, 4294901760
        %2693 = vmatmul.f32.gmra.mxu0 %v2692
        %v2694 = vpop.f32.mrf.mxu0
        %v2695 = vadd.f32 %v2670, %v2694
        %2696 = vdwg.mxu0
        %v2697 = vadd.f32 %v386, %v2695
        %2698 = vst.msk [vmem:[%s375] sm:$0xff] %vm393, %v2697
        %s2699 = sand.u32 %s266, 1
        %s2700 = scalar_lea.sflag [#allocation3], %s2699
        %s2701 = sand.u32 %s266, 1
        %s2702 = smul.addr %s2701, 8
        %s2703 = scalar_lea.vmem [#allocation2], %s2702
        // Predicated region
        $region61: #{tpu_custom_call.1} parent=59 // pred_check
          %p2704 = pneg %p276
        $region62: #{tpu_custom_call.1} parent=59 // pred_check_branch
          %2706 = sbr.rel (%p2704) target = $region64
        $region63: #{tpu_custom_call.1} parent=59 // pred_region
          %2708 = vsyncadd %s2700, 0
          %s2709 = sadd.s32 %s29, %s28
          %s2710 = smul.addr %s2709, 8
          %s2711 = scalar_lea.hbm %s10, %s2710
          %s2713 = sshll.u32 %s2703, 4
          %s2714 = int_to_ptr.vmem [resolvable:$true] %s2713
          %s2715 = sshll.u32 %s2711, 4
          %s2716 = int_to_ptr.hbm [resolvable:$true] %s2715
          %2718 = dma.vmem_to_hbm [thread:$0]  %s2714, 128, %s2716, %s2700
        $region64: #{tpu_custom_call.1} parent=59 // pred_fallthru
          _
      $region60: #{tpu_custom_call.1} parent=5 // pred_fallthru
        _
      %p2719 = scmp.le.s32.totalorder 2, %s19
      // Predicated region
      $region65: #{tpu_custom_call.1} parent=5 // pred_check
        %p2720 = pneg %p2719
      $region66: #{tpu_custom_call.1} parent=5 // pred_check_branch
        %2722 = sbr.rel (%p2720) target = $region68
      $region67: #{tpu_custom_call.1} parent=5 // pred_region
        %s2723 = ssub.s32 %s19, 2
        // Predicated region
        $region69: #{tpu_custom_call.1} parent=67 // pred_check
          %p2724 = pneg %p282
        $region70: #{tpu_custom_call.1} parent=67 // pred_check_branch
          %2726 = sbr.rel (%p2724) target = $region72
        $region71: #{tpu_custom_call.1} parent=67 // pred_region
          %s2727 = sand.u32 %s267, 1
          %s2728 = scalar_lea.sflag [#allocation3], %s2727
          %s2729 = sand.u32 %s267, 1
          %s2730 = smul.addr %s2729, 8
          %s2731 = scalar_lea.vmem [#allocation2], %s2730
          %2733 = dma.done %s2728, 128
        $region72: #{tpu_custom_call.1} parent=67 // pred_fallthru
          _
      $region68: #{tpu_custom_call.1} parent=5 // pred_fallthru
        _
    $region6: #{tpu_custom_call.1} parent=1 // loop_footer
      %s23 = sadd.s32 1, %s19
    $region7: #{tpu_custom_call.1} parent=1 // loop_footer_branch
      %18 = sbr.rel target = $region3
    $region8: #{tpu_custom_call.1} parent=1 // loop_exit
      _
    %2734 = vsyncpa [#allocation3], 1
    %s2735 = scalar_lea.sflag [#allocation3], 1
    %2736 = vsyncpa %s2735, 1

</llo_original>
